<compile_context>
chip_gen: v7x
topology: tpu7x:2x2x1
jax: 0.10.0
libtpu: 0.0.40
codegen_flags: <defaults>
</compile_context>

<pallas_src>
from functools import partial

import jax
import jax.numpy as jnp
import numpy as np
from jax import lax
from jax.experimental import pallas as pl
from jax.experimental.pallas import tpu as pltpu

EPS = 1e-5


# --------------------------- in-kernel helpers ---------------------------
def _make_tap_masks(H, W, P):
    """Per-tap validity masks for a 3x3 conv with padding=1 on a flattened
    (H*W,) lane axis.  Returns {(dh, dw): bool (1,1,P) or None (all valid)}."""
    lane = lax.broadcasted_iota(jnp.int32, (1, 1, P), 2)
    if (W & (W - 1)) == 0:                      # power-of-two fast path
        sh = W.bit_length() - 1
        h_idx = jnp.right_shift(lane, sh)
        w_idx = jnp.bitwise_and(lane, W - 1)
    else:
        h_idx = lane // W
        w_idx = lane - h_idx * W
    hmask = {-1: h_idx >= 1, 0: None, 1: h_idx <= H - 2}
    wmask = {-1: w_idx >= 1, 0: None, 1: w_idx <= W - 2}
    masks = {}
    for dh in (-1, 0, 1):
        for dw in (-1, 0, 1):
            parts = [m for m in (hmask[dh], wmask[dw]) if m is not None]
            if not parts:
                masks[(dh, dw)] = None
            elif len(parts) == 1:
                masks[(dh, dw)] = parts[0]
            else:
                masks[(dh, dw)] = jnp.logical_and(parts[0], parts[1])
    return masks


def _bn_relu(x, g_ref, b_ref):
    """Training-mode BatchNorm (biased variance, single stats pass) + ReLU.
    x: (N, Ch, P); gamma/beta refs: (Ch, 1)."""
    n, _, p = x.shape
    inv = 1.0 / float(n * p)
    s = jnp.sum(jnp.sum(x, axis=2, keepdims=True), axis=0, keepdims=True)        # (1,Ch,1)
    ss = jnp.sum(jnp.sum(x * x, axis=2, keepdims=True), axis=0, keepdims=True)   # (1,Ch,1)
    mean = s * inv
    var = ss * inv - mean * mean
    y = (x - mean) * lax.rsqrt(var + EPS) * g_ref[...] + b_ref[...]
    return jnp.maximum(y, 0.0)


def _dw3x3(x, w_ref, b_ref, masks, W, P):
    """Depthwise 3x3, padding=1, on channels-on-sublanes / pixels-on-lanes data.
    x: (N, Ch, P); w_ref: (9, Ch, 1); b_ref: (Ch, 1).
    The (dh, dw) neighbour shift is a lane rotation (XLU) + boundary mask."""
    acc = None
    for kh in range(3):
        for kw in range(3):
            dh, dw = kh - 1, kw - 1
            d = dh * W + dw                               # flattened pixel offset
            t = x if d == 0 else pltpu.roll(x, (-d) % P, 2)   # t[p] = x[p + d]
            m = masks[(dh, dw)]
            if m is not None:
                t = jnp.where(m, t, 0.0)
            term = t * w_ref[kh * 3 + kw]                 # per-channel tap weight
            acc = term if acc is None else acc + term
    return acc + b_ref[...]


def _pw1x1(x, w_ref, b_ref):
    """Pointwise 1x1 conv as VPU scaled-adds + sublane reduction (no MXU).
    x: (N, Cin, P); w_ref: (Cout, Cin, 1); b_ref: (Cout, 1) -> (N, Cout, P)."""
    w = w_ref[...]
    prod = x[:, None, :, :] * w[None, :, :, :]            # (N, Cout, Cin, P)
    return jnp.sum(prod, axis=2) + b_ref[...]             # (N, Cout, P)


# ------------------------------- kernel ----------------------------------
def conv_block_kernel(x_ref,
                      g1_ref, b1_ref, dw1w_ref, dw1b_ref, pw1w_ref, pw1b_ref,
                      g2_ref, b2_ref, dw2w_ref, dw2b_ref, pw2w_ref, pw2b_ref,
                      out_ref, *, H, W):
    P = H * W
    masks = _make_tap_masks(H, W, P)

    x = x_ref[...]                                        # (N, Cm, P), lane-dense
    h = _bn_relu(x, g1_ref, b1_ref)                       # BN1 + ReLU
    h = _dw3x3(h, dw1w_ref, dw1b_ref, masks, W, P)        # depthwise 3x3 (groups=Cm)
    h = _pw1x1(h, pw1w_ref, pw1b_ref)                     # 1x1: Cm -> C
    h = _bn_relu(h, g2_ref, b2_ref)                       # BN2 + ReLU
    h = _dw3x3(h, dw2w_ref, dw2b_ref, masks, W, P)        # depthwise 3x3 (groups=C)
    out_ref[...] = _pw1x1(h, pw2w_ref, pw2b_ref)          # 1x1: C -> Cm (dense store)


# ------------------------------- wrapper ----------------------------------
def conv_block_forward(x_nchw, p):
    """x_nchw: (N, Cm, H, W) float32. Params p in PyTorch layouts (OIHW etc.)."""
    N, Cm, H, W = x_nchw.shape
    C = p["pw1_b"].shape[0]
    P = H * W

    # Free reshape (contiguous dims merge) — no HBM transpose passes.
    x = x_nchw.reshape(N, Cm, P).astype(jnp.float32)

    def col(v):                                           # (Ch,) -> (Ch, 1)
        return v.reshape(-1, 1).astype(jnp.float32)

    g1 = col(p["bn1_g"]); b1 = col(p["bn1_b"])                              # (Cm,1)
    g2 = col(p["bn2_g"]); b2 = col(p["bn2_b"])                              # (C, 1)
    dw1w = jnp.transpose(p["dw1_w"][:, 0], (1, 2, 0)).reshape(9, Cm)[..., None]  # (9,Cm,1)
    dw1b = col(p["dw1_b"])
    pw1w = p["pw1_w"][:, :, 0, 0][..., None].astype(jnp.float32)            # (C, Cm, 1)
    pw1b = col(p["pw1_b"])
    dw2w = jnp.transpose(p["dw2_w"][:, 0], (1, 2, 0)).reshape(9, C)[..., None]   # (9,C,1)
    dw2b = col(p["dw2_b"])
    pw2w = p["pw2_w"][:, :, 0, 0][..., None].astype(jnp.float32)            # (Cm, C, 1)
    pw2b = col(p["pw2_b"])

    inputs = (x, g1, b1, dw1w, dw1b, pw1w, pw1b, g2, b2, dw2w, dw2b, pw2w, pw2b)
    vmem = pl.BlockSpec(memory_space=pltpu.MemorySpace.VMEM)

    out = pl.pallas_call(
        partial(conv_block_kernel, H=H, W=W),
        out_shape=jax.ShapeDtypeStruct((N, Cm, P), jnp.float32),
        in_specs=[vmem] * len(inputs),
        out_specs=vmem,
    )(*inputs)

    return out.reshape(N, Cm, H, W)                        # free reshape back to NCHW


# ---------------- pure-JAX reference (mirrors the PyTorch forward) ----------------
def reference_forward(x, p):
    def bn(x, g, b):
        m = x.mean(axis=(0, 2, 3), keepdims=True)
        v = ((x - m) ** 2).mean(axis=(0, 2, 3), keepdims=True)
        return (x - m) / jnp.sqrt(v + EPS) * g.reshape(1, -1, 1, 1) + b.reshape(1, -1, 1, 1)

    def conv(x, w, b, groups, pad):
        y = lax.conv_general_dilated(
            x, w, window_strides=(1, 1), padding=[(pad, pad), (pad, pad)],
            dimension_numbers=("NCHW", "OIHW", "NCHW"), feature_group_count=groups)
        return y + b.reshape(1, -1, 1, 1)

    h = jax.nn.relu(bn(x, p["bn1_g"], p["bn1_b"]))
    h = conv(h, p["dw1_w"], p["dw1_b"], h.shape[1], 1)
    h = conv(h, p["pw1_w"], p["pw1_b"], 1, 0)
    h = jax.nn.relu(bn(h, p["bn2_g"], p["bn2_b"]))
    h = conv(h, p["dw2_w"], p["dw2_b"], h.shape[1], 1)
    h = conv(h, p["pw2_w"], p["pw2_b"], 1, 0)
    return h


if __name__ == "__main__":
    nChannels, multiply = 4, 2
    Cm, C = nChannels * multiply, nChannels        # 8, 4
    N, H, W = 2, 16, 16                            # H*W = 256 -> lane-dense

    key = jax.random.PRNGKey(0)
    ks = jax.random.split(key, 12)
    f32 = jnp.float32

    params = {
        # conv weights in PyTorch layouts
        "dw1_w": 0.1 * jax.random.normal(ks[0], (Cm, 1, 3, 3), f32),
        "dw1_b": 0.1 * jax.random.normal(ks[1], (Cm,), f32),
        "pw1_w": 0.1 * jax.random.normal(ks[2], (C, Cm, 1, 1), f32),
        "pw1_b": 0.1 * jax.random.normal(ks[3], (C,), f32),
        "dw2_w": 0.1 * jax.random.normal(ks[4], (C, 1, 3, 3), f32),
        "dw2_b": 0.1 * jax.random.normal(ks[5], (C,), f32),
        "pw2_w": 0.1 * jax.random.normal(ks[6], (Cm, C, 1, 1), f32),
        "pw2_b": 0.1 * jax.random.normal(ks[7], (Cm,), f32),
        # batchnorm affine params
        "bn1_g": 1.0 + 0.1 * jax.random.normal(ks[8], (Cm,), f32),
        "bn1_b": 0.1 * jax.random.normal(ks[9], (Cm,), f32),
        "bn2_g": 1.0 + 0.1 * jax.random.normal(ks[10], (C,), f32),
        "bn2_b": 0.1 * jax.random.normal(ks[11], (C,), f32),
    }

    x = jax.random.normal(jax.random.PRNGKey(42), (N, Cm, H, W), f32)

    out = jax.jit(conv_block_forward)(x, params)
    out = jax.block_until_ready(out)

    ref = reference_forward(x, params)
    np.testing.assert_allclose(np.asarray(out), np.asarray(ref), rtol=2e-3, atol=5e-4)

    print("KERNEL_OK")
</pallas_src>

<mosaic_0001>
module attributes {stable_mosaic.version = 11 : i64} {
  func.func @conv_block_kernel(%arg0: memref<2x8x256xf32, #tpu.memory_space<vmem>>, %arg1: memref<8x1xf32, #tpu.memory_space<vmem>>, %arg2: memref<8x1xf32, #tpu.memory_space<vmem>>, %arg3: memref<9x8x1xf32, #tpu.memory_space<vmem>>, %arg4: memref<8x1xf32, #tpu.memory_space<vmem>>, %arg5: memref<4x8x1xf32, #tpu.memory_space<vmem>>, %arg6: memref<4x1xf32, #tpu.memory_space<vmem>>, %arg7: memref<4x1xf32, #tpu.memory_space<vmem>>, %arg8: memref<4x1xf32, #tpu.memory_space<vmem>>, %arg9: memref<9x4x1xf32, #tpu.memory_space<vmem>>, %arg10: memref<4x1xf32, #tpu.memory_space<vmem>>, %arg11: memref<8x4x1xf32, #tpu.memory_space<vmem>>, %arg12: memref<8x1xf32, #tpu.memory_space<vmem>>, %arg13: memref<2x8x256xf32, #tpu.memory_space<vmem>>) attributes {dimension_semantics = [], scalar_prefetch = 0 : i64, scratch_operands = 0 : i64, tpu.core_type = #tpu.core_type<tc>} {
    %0 = tpu.iota {dimensions = array<i32: 2>} : vector<1x1x256xi32>
    %c4_i32 = arith.constant 4 : i32
    %1 = vector.broadcast %c4_i32 : i32 to vector<1x1x256xi32>
    %2 = arith.shrsi %0, %1 : vector<1x1x256xi32>
    %c15_i32 = arith.constant 15 : i32
    %3 = vector.broadcast %c15_i32 : i32 to vector<1x1x256xi32>
    %4 = arith.andi %0, %3 : vector<1x1x256xi32>
    %c1_i32 = arith.constant 1 : i32
    %5 = vector.broadcast %c1_i32 : i32 to vector<1x1x256xi32>
    %6 = arith.cmpi sge, %2, %5 : vector<1x1x256xi32>
    %c14_i32 = arith.constant 14 : i32
    %7 = vector.broadcast %c14_i32 : i32 to vector<1x1x256xi32>
    %8 = arith.cmpi sle, %2, %7 : vector<1x1x256xi32>
    %c1_i32_0 = arith.constant 1 : i32
    %9 = vector.broadcast %c1_i32_0 : i32 to vector<1x1x256xi32>
    %10 = arith.cmpi sge, %4, %9 : vector<1x1x256xi32>
    %c14_i32_1 = arith.constant 14 : i32
    %11 = vector.broadcast %c14_i32_1 : i32 to vector<1x1x256xi32>
    %12 = arith.cmpi sle, %4, %11 : vector<1x1x256xi32>
    %13 = arith.andi %6, %10 : vector<1x1x256xi1>
    %14 = arith.andi %6, %12 : vector<1x1x256xi1>
    %15 = arith.andi %8, %10 : vector<1x1x256xi1>
    %16 = arith.andi %8, %12 : vector<1x1x256xi1>
    %c0 = arith.constant 0 : index
    %c0_2 = arith.constant 0 : index
    %c0_3 = arith.constant 0 : index
    %17 = vector.load %arg0[%c0, %c0_2, %c0_3] : memref<2x8x256xf32, #tpu.memory_space<vmem>>, vector<2x8x256xf32>
    %cst = arith.constant dense<0.000000e+00> : vector<2x8xf32>
    %18 = vector.multi_reduction <add>, %17, %cst [2] : vector<2x8x256xf32> to vector<2x8xf32>
    %19 = vector.shape_cast %18 : vector<2x8xf32> to vector<2x8x1xf32>
    %cst_4 = arith.constant dense<0.000000e+00> : vector<8x1xf32>
    %20 = vector.multi_reduction <add>, %19, %cst_4 [0] : vector<2x8x1xf32> to vector<8x1xf32>
    %21 = vector.shape_cast %20 : vector<8x1xf32> to vector<1x8x1xf32>
    %22 = arith.mulf %17, %17 : vector<2x8x256xf32>
    %cst_5 = arith.constant dense<0.000000e+00> : vector<2x8xf32>
    %23 = vector.multi_reduction <add>, %22, %cst_5 [2] : vector<2x8x256xf32> to vector<2x8xf32>
    %24 = vector.shape_cast %23 : vector<2x8xf32> to vector<2x8x1xf32>
    %cst_6 = arith.constant dense<0.000000e+00> : vector<8x1xf32>
    %25 = vector.multi_reduction <add>, %24, %cst_6 [0] : vector<2x8x1xf32> to vector<8x1xf32>
    %26 = vector.shape_cast %25 : vector<8x1xf32> to vector<1x8x1xf32>
    %cst_7 = arith.constant 0.001953125 : f32
    %27 = vector.broadcast %cst_7 : f32 to vector<1x8x1xf32>
    %28 = arith.mulf %21, %27 : vector<1x8x1xf32>
    %cst_8 = arith.constant 0.001953125 : f32
    %29 = vector.broadcast %cst_8 : f32 to vector<1x8x1xf32>
    %30 = arith.mulf %26, %29 : vector<1x8x1xf32>
    %31 = arith.mulf %28, %28 : vector<1x8x1xf32>
    %32 = arith.subf %30, %31 : vector<1x8x1xf32>
    %33 = vector.broadcast %28 : vector<1x8x1xf32> to vector<2x8x256xf32>
    %34 = arith.subf %17, %33 : vector<2x8x256xf32>
    %cst_9 = arith.constant 9.99999974E-6 : f32
    %35 = vector.broadcast %cst_9 : f32 to vector<1x8x1xf32>
    %36 = arith.addf %32, %35 : vector<1x8x1xf32>
    %37 = math.rsqrt %36 : vector<1x8x1xf32>
    %38 = vector.broadcast %37 : vector<1x8x1xf32> to vector<2x8x256xf32>
    %39 = arith.mulf %34, %38 : vector<2x8x256xf32>
    %c0_10 = arith.constant 0 : index
    %c0_11 = arith.constant 0 : index
    %40 = vector.load %arg1[%c0_10, %c0_11] : memref<8x1xf32, #tpu.memory_space<vmem>>, vector<8x1xf32>
    %41 = vector.shape_cast %40 : vector<8x1xf32> to vector<1x8x1xf32>
    %42 = vector.broadcast %41 : vector<1x8x1xf32> to vector<2x8x256xf32>
    %43 = arith.mulf %39, %42 : vector<2x8x256xf32>
    %c0_12 = arith.constant 0 : index
    %c0_13 = arith.constant 0 : index
    %44 = vector.load %arg2[%c0_12, %c0_13] : memref<8x1xf32, #tpu.memory_space<vmem>>, vector<8x1xf32>
    %45 = vector.shape_cast %44 : vector<8x1xf32> to vector<1x8x1xf32>
    %46 = vector.broadcast %45 : vector<1x8x1xf32> to vector<2x8x256xf32>
    %47 = arith.addf %43, %46 : vector<2x8x256xf32>
    %cst_14 = arith.constant 0.000000e+00 : f32
    %48 = vector.broadcast %cst_14 : f32 to vector<2x8x256xf32>
    %49 = arith.maximumf %47, %48 : vector<2x8x256xf32>
    %c17_i32 = arith.constant 17 : i32
    %50 = tpu.dynamic_rotate %49 by %c17_i32 dim 2 : vector<2x8x256xf32>, i32 -> vector<2x8x256xf32>
    %cst_15 = arith.constant 0.000000e+00 : f32
    %51 = vector.shape_cast %13 : vector<1x1x256xi1> to vector<1x1x256xi1>
    %52 = vector.broadcast %51 : vector<1x1x256xi1> to vector<2x8x256xi1>
    %53 = vector.broadcast %cst_15 : f32 to vector<2x8x256xf32>
    %54 = arith.select %52, %50, %53 : vector<2x8x256xi1>, vector<2x8x256xf32>
    %c0_16 = arith.constant 0 : index
    %c0_17 = arith.constant 0 : index
    %c0_18 = arith.constant 0 : index
    %55 = vector.load %arg3[%c0_16, %c0_17, %c0_18] : memref<9x8x1xf32, #tpu.memory_space<vmem>>, vector<1x8x1xf32>
    %56 = vector.shape_cast %55 : vector<1x8x1xf32> to vector<8x1xf32>
    %57 = vector.shape_cast %56 : vector<8x1xf32> to vector<1x8x1xf32>
    %58 = vector.broadcast %57 : vector<1x8x1xf32> to vector<2x8x256xf32>
    %59 = arith.mulf %54, %58 : vector<2x8x256xf32>
    %c16_i32 = arith.constant 16 : i32
    %60 = tpu.dynamic_rotate %49 by %c16_i32 dim 2 : vector<2x8x256xf32>, i32 -> vector<2x8x256xf32>
    %cst_19 = arith.constant 0.000000e+00 : f32
    %61 = vector.shape_cast %6 : vector<1x1x256xi1> to vector<1x1x256xi1>
    %62 = vector.broadcast %61 : vector<1x1x256xi1> to vector<2x8x256xi1>
    %63 = vector.broadcast %cst_19 : f32 to vector<2x8x256xf32>
    %64 = arith.select %62, %60, %63 : vector<2x8x256xi1>, vector<2x8x256xf32>
    %c1 = arith.constant 1 : index
    %c0_20 = arith.constant 0 : index
    %c0_21 = arith.constant 0 : index
    %65 = vector.load %arg3[%c1, %c0_20, %c0_21] : memref<9x8x1xf32, #tpu.memory_space<vmem>>, vector<1x8x1xf32>
    %66 = vector.shape_cast %65 : vector<1x8x1xf32> to vector<8x1xf32>
    %67 = vector.shape_cast %66 : vector<8x1xf32> to vector<1x8x1xf32>
    %68 = vector.broadcast %67 : vector<1x8x1xf32> to vector<2x8x256xf32>
    %69 = arith.mulf %64, %68 : vector<2x8x256xf32>
    %70 = arith.addf %59, %69 : vector<2x8x256xf32>
    %c15_i32_22 = arith.constant 15 : i32
    %71 = tpu.dynamic_rotate %49 by %c15_i32_22 dim 2 : vector<2x8x256xf32>, i32 -> vector<2x8x256xf32>
    %cst_23 = arith.constant 0.000000e+00 : f32
    %72 = vector.shape_cast %14 : vector<1x1x256xi1> to vector<1x1x256xi1>
    %73 = vector.broadcast %72 : vector<1x1x256xi1> to vector<2x8x256xi1>
    %74 = vector.broadcast %cst_23 : f32 to vector<2x8x256xf32>
    %75 = arith.select %73, %71, %74 : vector<2x8x256xi1>, vector<2x8x256xf32>
    %c2 = arith.constant 2 : index
    %c0_24 = arith.constant 0 : index
    %c0_25 = arith.constant 0 : index
    %76 = vector.load %arg3[%c2, %c0_24, %c0_25] : memref<9x8x1xf32, #tpu.memory_space<vmem>>, vector<1x8x1xf32>
    %77 = vector.shape_cast %76 : vector<1x8x1xf32> to vector<8x1xf32>
    %78 = vector.shape_cast %77 : vector<8x1xf32> to vector<1x8x1xf32>
    %79 = vector.broadcast %78 : vector<1x8x1xf32> to vector<2x8x256xf32>
    %80 = arith.mulf %75, %79 : vector<2x8x256xf32>
    %81 = arith.addf %70, %80 : vector<2x8x256xf32>
    %c1_i32_26 = arith.constant 1 : i32
    %82 = tpu.dynamic_rotate %49 by %c1_i32_26 dim 2 : vector<2x8x256xf32>, i32 -> vector<2x8x256xf32>
    %cst_27 = arith.constant 0.000000e+00 : f32
    %83 = vector.shape_cast %10 : vector<1x1x256xi1> to vector<1x1x256xi1>
    %84 = vector.broadcast %83 : vector<1x1x256xi1> to vector<2x8x256xi1>
    %85 = vector.broadcast %cst_27 : f32 to vector<2x8x256xf32>
    %86 = arith.select %84, %82, %85 : vector<2x8x256xi1>, vector<2x8x256xf32>
    %c3 = arith.constant 3 : index
    %c0_28 = arith.constant 0 : index
    %c0_29 = arith.constant 0 : index
    %87 = vector.load %arg3[%c3, %c0_28, %c0_29] : memref<9x8x1xf32, #tpu.memory_space<vmem>>, vector<1x8x1xf32>
    %88 = vector.shape_cast %87 : vector<1x8x1xf32> to vector<8x1xf32>
    %89 = vector.shape_cast %88 : vector<8x1xf32> to vector<1x8x1xf32>
    %90 = vector.broadcast %89 : vector<1x8x1xf32> to vector<2x8x256xf32>
    %91 = arith.mulf %86, %90 : vector<2x8x256xf32>
    %92 = arith.addf %81, %91 : vector<2x8x256xf32>
    %c4 = arith.constant 4 : index
    %c0_30 = arith.constant 0 : index
    %c0_31 = arith.constant 0 : index
    %93 = vector.load %arg3[%c4, %c0_30, %c0_31] : memref<9x8x1xf32, #tpu.memory_space<vmem>>, vector<1x8x1xf32>
    %94 = vector.shape_cast %93 : vector<1x8x1xf32> to vector<8x1xf32>
    %95 = vector.shape_cast %94 : vector<8x1xf32> to vector<1x8x1xf32>
    %96 = vector.broadcast %95 : vector<1x8x1xf32> to vector<2x8x256xf32>
    %97 = arith.mulf %49, %96 : vector<2x8x256xf32>
    %98 = arith.addf %92, %97 : vector<2x8x256xf32>
    %c255_i32 = arith.constant 255 : i32
    %99 = tpu.dynamic_rotate %49 by %c255_i32 dim 2 : vector<2x8x256xf32>, i32 -> vector<2x8x256xf32>
    %cst_32 = arith.constant 0.000000e+00 : f32
    %100 = vector.shape_cast %12 : vector<1x1x256xi1> to vector<1x1x256xi1>
    %101 = vector.broadcast %100 : vector<1x1x256xi1> to vector<2x8x256xi1>
    %102 = vector.broadcast %cst_32 : f32 to vector<2x8x256xf32>
    %103 = arith.select %101, %99, %102 : vector<2x8x256xi1>, vector<2x8x256xf32>
    %c5 = arith.constant 5 : index
    %c0_33 = arith.constant 0 : index
    %c0_34 = arith.constant 0 : index
    %104 = vector.load %arg3[%c5, %c0_33, %c0_34] : memref<9x8x1xf32, #tpu.memory_space<vmem>>, vector<1x8x1xf32>
    %105 = vector.shape_cast %104 : vector<1x8x1xf32> to vector<8x1xf32>
    %106 = vector.shape_cast %105 : vector<8x1xf32> to vector<1x8x1xf32>
    %107 = vector.broadcast %106 : vector<1x8x1xf32> to vector<2x8x256xf32>
    %108 = arith.mulf %103, %107 : vector<2x8x256xf32>
    %109 = arith.addf %98, %108 : vector<2x8x256xf32>
    %c241_i32 = arith.constant 241 : i32
    %110 = tpu.dynamic_rotate %49 by %c241_i32 dim 2 : vector<2x8x256xf32>, i32 -> vector<2x8x256xf32>
    %cst_35 = arith.constant 0.000000e+00 : f32
    %111 = vector.shape_cast %15 : vector<1x1x256xi1> to vector<1x1x256xi1>
    %112 = vector.broadcast %111 : vector<1x1x256xi1> to vector<2x8x256xi1>
    %113 = vector.broadcast %cst_35 : f32 to vector<2x8x256xf32>
    %114 = arith.select %112, %110, %113 : vector<2x8x256xi1>, vector<2x8x256xf32>
    %c6 = arith.constant 6 : index
    %c0_36 = arith.constant 0 : index
    %c0_37 = arith.constant 0 : index
    %115 = vector.load %arg3[%c6, %c0_36, %c0_37] : memref<9x8x1xf32, #tpu.memory_space<vmem>>, vector<1x8x1xf32>
    %116 = vector.shape_cast %115 : vector<1x8x1xf32> to vector<8x1xf32>
    %117 = vector.shape_cast %116 : vector<8x1xf32> to vector<1x8x1xf32>
    %118 = vector.broadcast %117 : vector<1x8x1xf32> to vector<2x8x256xf32>
    %119 = arith.mulf %114, %118 : vector<2x8x256xf32>
    %120 = arith.addf %109, %119 : vector<2x8x256xf32>
    %c240_i32 = arith.constant 240 : i32
    %121 = tpu.dynamic_rotate %49 by %c240_i32 dim 2 : vector<2x8x256xf32>, i32 -> vector<2x8x256xf32>
    %cst_38 = arith.constant 0.000000e+00 : f32
    %122 = vector.shape_cast %8 : vector<1x1x256xi1> to vector<1x1x256xi1>
    %123 = vector.broadcast %122 : vector<1x1x256xi1> to vector<2x8x256xi1>
    %124 = vector.broadcast %cst_38 : f32 to vector<2x8x256xf32>
    %125 = arith.select %123, %121, %124 : vector<2x8x256xi1>, vector<2x8x256xf32>
    %c7 = arith.constant 7 : index
    %c0_39 = arith.constant 0 : index
    %c0_40 = arith.constant 0 : index
    %126 = vector.load %arg3[%c7, %c0_39, %c0_40] : memref<9x8x1xf32, #tpu.memory_space<vmem>>, vector<1x8x1xf32>
    %127 = vector.shape_cast %126 : vector<1x8x1xf32> to vector<8x1xf32>
    %128 = vector.shape_cast %127 : vector<8x1xf32> to vector<1x8x1xf32>
    %129 = vector.broadcast %128 : vector<1x8x1xf32> to vector<2x8x256xf32>
    %130 = arith.mulf %125, %129 : vector<2x8x256xf32>
    %131 = arith.addf %120, %130 : vector<2x8x256xf32>
    %c239_i32 = arith.constant 239 : i32
    %132 = tpu.dynamic_rotate %49 by %c239_i32 dim 2 : vector<2x8x256xf32>, i32 -> vector<2x8x256xf32>
    %cst_41 = arith.constant 0.000000e+00 : f32
    %133 = vector.shape_cast %16 : vector<1x1x256xi1> to vector<1x1x256xi1>
    %134 = vector.broadcast %133 : vector<1x1x256xi1> to vector<2x8x256xi1>
    %135 = vector.broadcast %cst_41 : f32 to vector<2x8x256xf32>
    %136 = arith.select %134, %132, %135 : vector<2x8x256xi1>, vector<2x8x256xf32>
    %c8 = arith.constant 8 : index
    %c0_42 = arith.constant 0 : index
    %c0_43 = arith.constant 0 : index
    %137 = vector.load %arg3[%c8, %c0_42, %c0_43] : memref<9x8x1xf32, #tpu.memory_space<vmem>>, vector<1x8x1xf32>
    %138 = vector.shape_cast %137 : vector<1x8x1xf32> to vector<8x1xf32>
    %139 = vector.shape_cast %138 : vector<8x1xf32> to vector<1x8x1xf32>
    %140 = vector.broadcast %139 : vector<1x8x1xf32> to vector<2x8x256xf32>
    %141 = arith.mulf %136, %140 : vector<2x8x256xf32>
    %142 = arith.addf %131, %141 : vector<2x8x256xf32>
    %c0_44 = arith.constant 0 : index
    %c0_45 = arith.constant 0 : index
    %143 = vector.load %arg4[%c0_44, %c0_45] : memref<8x1xf32, #tpu.memory_space<vmem>>, vector<8x1xf32>
    %144 = vector.shape_cast %143 : vector<8x1xf32> to vector<1x8x1xf32>
    %145 = vector.broadcast %144 : vector<1x8x1xf32> to vector<2x8x256xf32>
    %146 = arith.addf %142, %145 : vector<2x8x256xf32>
    %c0_46 = arith.constant 0 : index
    %c0_47 = arith.constant 0 : index
    %c0_48 = arith.constant 0 : index
    %147 = vector.load %arg5[%c0_46, %c0_47, %c0_48] : memref<4x8x1xf32, #tpu.memory_space<vmem>>, vector<4x8x1xf32>
    %148 = vector.shape_cast %146 : vector<2x8x256xf32> to vector<2x1x8x256xf32>
    %149 = vector.shape_cast %147 : vector<4x8x1xf32> to vector<1x4x8x1xf32>
    %150 = vector.broadcast %148 : vector<2x1x8x256xf32> to vector<2x4x8x256xf32>
    %151 = vector.broadcast %149 : vector<1x4x8x1xf32> to vector<2x4x8x256xf32>
    %152 = arith.mulf %150, %151 : vector<2x4x8x256xf32>
    %cst_49 = arith.constant dense<0.000000e+00> : vector<2x4x256xf32>
    %153 = vector.multi_reduction <add>, %152, %cst_49 [2] : vector<2x4x8x256xf32> to vector<2x4x256xf32>
    %c0_50 = arith.constant 0 : index
    %c0_51 = arith.constant 0 : index
    %154 = vector.load %arg6[%c0_50, %c0_51] : memref<4x1xf32, #tpu.memory_space<vmem>>, vector<4x1xf32>
    %155 = vector.shape_cast %154 : vector<4x1xf32> to vector<1x4x1xf32>
    %156 = vector.broadcast %155 : vector<1x4x1xf32> to vector<2x4x256xf32>
    %157 = arith.addf %153, %156 : vector<2x4x256xf32>
    %cst_52 = arith.constant dense<0.000000e+00> : vector<2x4xf32>
    %158 = vector.multi_reduction <add>, %157, %cst_52 [2] : vector<2x4x256xf32> to vector<2x4xf32>
    %159 = vector.shape_cast %158 : vector<2x4xf32> to vector<2x4x1xf32>
    %cst_53 = arith.constant dense<0.000000e+00> : vector<4x1xf32>
    %160 = vector.multi_reduction <add>, %159, %cst_53 [0] : vector<2x4x1xf32> to vector<4x1xf32>
    %161 = vector.shape_cast %160 : vector<4x1xf32> to vector<1x4x1xf32>
    %162 = arith.mulf %157, %157 : vector<2x4x256xf32>
    %cst_54 = arith.constant dense<0.000000e+00> : vector<2x4xf32>
    %163 = vector.multi_reduction <add>, %162, %cst_54 [2] : vector<2x4x256xf32> to vector<2x4xf32>
    %164 = vector.shape_cast %163 : vector<2x4xf32> to vector<2x4x1xf32>
    %cst_55 = arith.constant dense<0.000000e+00> : vector<4x1xf32>
    %165 = vector.multi_reduction <add>, %164, %cst_55 [0] : vector<2x4x1xf32> to vector<4x1xf32>
    %166 = vector.shape_cast %165 : vector<4x1xf32> to vector<1x4x1xf32>
    %cst_56 = arith.constant 0.001953125 : f32
    %167 = vector.broadcast %cst_56 : f32 to vector<1x4x1xf32>
    %168 = arith.mulf %161, %167 : vector<1x4x1xf32>
    %cst_57 = arith.constant 0.001953125 : f32
    %169 = vector.broadcast %cst_57 : f32 to vector<1x4x1xf32>
    %170 = arith.mulf %166, %169 : vector<1x4x1xf32>
    %171 = arith.mulf %168, %168 : vector<1x4x1xf32>
    %172 = arith.subf %170, %171 : vector<1x4x1xf32>
    %173 = vector.broadcast %168 : vector<1x4x1xf32> to vector<2x4x256xf32>
    %174 = arith.subf %157, %173 : vector<2x4x256xf32>
    %cst_58 = arith.constant 9.99999974E-6 : f32
    %175 = vector.broadcast %cst_58 : f32 to vector<1x4x1xf32>
    %176 = arith.addf %172, %175 : vector<1x4x1xf32>
    %177 = math.rsqrt %176 : vector<1x4x1xf32>
    %178 = vector.broadcast %177 : vector<1x4x1xf32> to vector<2x4x256xf32>
    %179 = arith.mulf %174, %178 : vector<2x4x256xf32>
    %c0_59 = arith.constant 0 : index
    %c0_60 = arith.constant 0 : index
    %180 = vector.load %arg7[%c0_59, %c0_60] : memref<4x1xf32, #tpu.memory_space<vmem>>, vector<4x1xf32>
    %181 = vector.shape_cast %180 : vector<4x1xf32> to vector<1x4x1xf32>
    %182 = vector.broadcast %181 : vector<1x4x1xf32> to vector<2x4x256xf32>
    %183 = arith.mulf %179, %182 : vector<2x4x256xf32>
    %c0_61 = arith.constant 0 : index
    %c0_62 = arith.constant 0 : index
    %184 = vector.load %arg8[%c0_61, %c0_62] : memref<4x1xf32, #tpu.memory_space<vmem>>, vector<4x1xf32>
    %185 = vector.shape_cast %184 : vector<4x1xf32> to vector<1x4x1xf32>
    %186 = vector.broadcast %185 : vector<1x4x1xf32> to vector<2x4x256xf32>
    %187 = arith.addf %183, %186 : vector<2x4x256xf32>
    %cst_63 = arith.constant 0.000000e+00 : f32
    %188 = vector.broadcast %cst_63 : f32 to vector<2x4x256xf32>
    %189 = arith.maximumf %187, %188 : vector<2x4x256xf32>
    %c17_i32_64 = arith.constant 17 : i32
    %190 = tpu.dynamic_rotate %189 by %c17_i32_64 dim 2 : vector<2x4x256xf32>, i32 -> vector<2x4x256xf32>
    %cst_65 = arith.constant 0.000000e+00 : f32
    %191 = vector.shape_cast %13 : vector<1x1x256xi1> to vector<1x1x256xi1>
    %192 = vector.broadcast %191 : vector<1x1x256xi1> to vector<2x4x256xi1>
    %193 = vector.broadcast %cst_65 : f32 to vector<2x4x256xf32>
    %194 = arith.select %192, %190, %193 : vector<2x4x256xi1>, vector<2x4x256xf32>
    %c0_66 = arith.constant 0 : index
    %c0_67 = arith.constant 0 : index
    %c0_68 = arith.constant 0 : index
    %195 = vector.load %arg9[%c0_66, %c0_67, %c0_68] : memref<9x4x1xf32, #tpu.memory_space<vmem>>, vector<1x4x1xf32>
    %196 = vector.shape_cast %195 : vector<1x4x1xf32> to vector<4x1xf32>
    %197 = vector.shape_cast %196 : vector<4x1xf32> to vector<1x4x1xf32>
    %198 = vector.broadcast %197 : vector<1x4x1xf32> to vector<2x4x256xf32>
    %199 = arith.mulf %194, %198 : vector<2x4x256xf32>
    %c16_i32_69 = arith.constant 16 : i32
    %200 = tpu.dynamic_rotate %189 by %c16_i32_69 dim 2 : vector<2x4x256xf32>, i32 -> vector<2x4x256xf32>
    %cst_70 = arith.constant 0.000000e+00 : f32
    %201 = vector.shape_cast %6 : vector<1x1x256xi1> to vector<1x1x256xi1>
    %202 = vector.broadcast %201 : vector<1x1x256xi1> to vector<2x4x256xi1>
    %203 = vector.broadcast %cst_70 : f32 to vector<2x4x256xf32>
    %204 = arith.select %202, %200, %203 : vector<2x4x256xi1>, vector<2x4x256xf32>
    %c1_71 = arith.constant 1 : index
    %c0_72 = arith.constant 0 : index
    %c0_73 = arith.constant 0 : index
    %205 = vector.load %arg9[%c1_71, %c0_72, %c0_73] : memref<9x4x1xf32, #tpu.memory_space<vmem>>, vector<1x4x1xf32>
    %206 = vector.shape_cast %205 : vector<1x4x1xf32> to vector<4x1xf32>
    %207 = vector.shape_cast %206 : vector<4x1xf32> to vector<1x4x1xf32>
    %208 = vector.broadcast %207 : vector<1x4x1xf32> to vector<2x4x256xf32>
    %209 = arith.mulf %204, %208 : vector<2x4x256xf32>
    %210 = arith.addf %199, %209 : vector<2x4x256xf32>
    %c15_i32_74 = arith.constant 15 : i32
    %211 = tpu.dynamic_rotate %189 by %c15_i32_74 dim 2 : vector<2x4x256xf32>, i32 -> vector<2x4x256xf32>
    %cst_75 = arith.constant 0.000000e+00 : f32
    %212 = vector.shape_cast %14 : vector<1x1x256xi1> to vector<1x1x256xi1>
    %213 = vector.broadcast %212 : vector<1x1x256xi1> to vector<2x4x256xi1>
    %214 = vector.broadcast %cst_75 : f32 to vector<2x4x256xf32>
    %215 = arith.select %213, %211, %214 : vector<2x4x256xi1>, vector<2x4x256xf32>
    %c2_76 = arith.constant 2 : index
    %c0_77 = arith.constant 0 : index
    %c0_78 = arith.constant 0 : index
    %216 = vector.load %arg9[%c2_76, %c0_77, %c0_78] : memref<9x4x1xf32, #tpu.memory_space<vmem>>, vector<1x4x1xf32>
    %217 = vector.shape_cast %216 : vector<1x4x1xf32> to vector<4x1xf32>
    %218 = vector.shape_cast %217 : vector<4x1xf32> to vector<1x4x1xf32>
    %219 = vector.broadcast %218 : vector<1x4x1xf32> to vector<2x4x256xf32>
    %220 = arith.mulf %215, %219 : vector<2x4x256xf32>
    %221 = arith.addf %210, %220 : vector<2x4x256xf32>
    %c1_i32_79 = arith.constant 1 : i32
    %222 = tpu.dynamic_rotate %189 by %c1_i32_79 dim 2 : vector<2x4x256xf32>, i32 -> vector<2x4x256xf32>
    %cst_80 = arith.constant 0.000000e+00 : f32
    %223 = vector.shape_cast %10 : vector<1x1x256xi1> to vector<1x1x256xi1>
    %224 = vector.broadcast %223 : vector<1x1x256xi1> to vector<2x4x256xi1>
    %225 = vector.broadcast %cst_80 : f32 to vector<2x4x256xf32>
    %226 = arith.select %224, %222, %225 : vector<2x4x256xi1>, vector<2x4x256xf32>
    %c3_81 = arith.constant 3 : index
    %c0_82 = arith.constant 0 : index
    %c0_83 = arith.constant 0 : index
    %227 = vector.load %arg9[%c3_81, %c0_82, %c0_83] : memref<9x4x1xf32, #tpu.memory_space<vmem>>, vector<1x4x1xf32>
    %228 = vector.shape_cast %227 : vector<1x4x1xf32> to vector<4x1xf32>
    %229 = vector.shape_cast %228 : vector<4x1xf32> to vector<1x4x1xf32>
    %230 = vector.broadcast %229 : vector<1x4x1xf32> to vector<2x4x256xf32>
    %231 = arith.mulf %226, %230 : vector<2x4x256xf32>
    %232 = arith.addf %221, %231 : vector<2x4x256xf32>
    %c4_84 = arith.constant 4 : index
    %c0_85 = arith.constant 0 : index
    %c0_86 = arith.constant 0 : index
    %233 = vector.load %arg9[%c4_84, %c0_85, %c0_86] : memref<9x4x1xf32, #tpu.memory_space<vmem>>, vector<1x4x1xf32>
    %234 = vector.shape_cast %233 : vector<1x4x1xf32> to vector<4x1xf32>
    %235 = vector.shape_cast %234 : vector<4x1xf32> to vector<1x4x1xf32>
    %236 = vector.broadcast %235 : vector<1x4x1xf32> to vector<2x4x256xf32>
    %237 = arith.mulf %189, %236 : vector<2x4x256xf32>
    %238 = arith.addf %232, %237 : vector<2x4x256xf32>
    %c255_i32_87 = arith.constant 255 : i32
    %239 = tpu.dynamic_rotate %189 by %c255_i32_87 dim 2 : vector<2x4x256xf32>, i32 -> vector<2x4x256xf32>
    %cst_88 = arith.constant 0.000000e+00 : f32
    %240 = vector.shape_cast %12 : vector<1x1x256xi1> to vector<1x1x256xi1>
    %241 = vector.broadcast %240 : vector<1x1x256xi1> to vector<2x4x256xi1>
    %242 = vector.broadcast %cst_88 : f32 to vector<2x4x256xf32>
    %243 = arith.select %241, %239, %242 : vector<2x4x256xi1>, vector<2x4x256xf32>
    %c5_89 = arith.constant 5 : index
    %c0_90 = arith.constant 0 : index
    %c0_91 = arith.constant 0 : index
    %244 = vector.load %arg9[%c5_89, %c0_90, %c0_91] : memref<9x4x1xf32, #tpu.memory_space<vmem>>, vector<1x4x1xf32>
    %245 = vector.shape_cast %244 : vector<1x4x1xf32> to vector<4x1xf32>
    %246 = vector.shape_cast %245 : vector<4x1xf32> to vector<1x4x1xf32>
    %247 = vector.broadcast %246 : vector<1x4x1xf32> to vector<2x4x256xf32>
    %248 = arith.mulf %243, %247 : vector<2x4x256xf32>
    %249 = arith.addf %238, %248 : vector<2x4x256xf32>
    %c241_i32_92 = arith.constant 241 : i32
    %250 = tpu.dynamic_rotate %189 by %c241_i32_92 dim 2 : vector<2x4x256xf32>, i32 -> vector<2x4x256xf32>
    %cst_93 = arith.constant 0.000000e+00 : f32
    %251 = vector.shape_cast %15 : vector<1x1x256xi1> to vector<1x1x256xi1>
    %252 = vector.broadcast %251 : vector<1x1x256xi1> to vector<2x4x256xi1>
    %253 = vector.broadcast %cst_93 : f32 to vector<2x4x256xf32>
    %254 = arith.select %252, %250, %253 : vector<2x4x256xi1>, vector<2x4x256xf32>
    %c6_94 = arith.constant 6 : index
    %c0_95 = arith.constant 0 : index
    %c0_96 = arith.constant 0 : index
    %255 = vector.load %arg9[%c6_94, %c0_95, %c0_96] : memref<9x4x1xf32, #tpu.memory_space<vmem>>, vector<1x4x1xf32>
    %256 = vector.shape_cast %255 : vector<1x4x1xf32> to vector<4x1xf32>
    %257 = vector.shape_cast %256 : vector<4x1xf32> to vector<1x4x1xf32>
    %258 = vector.broadcast %257 : vector<1x4x1xf32> to vector<2x4x256xf32>
    %259 = arith.mulf %254, %258 : vector<2x4x256xf32>
    %260 = arith.addf %249, %259 : vector<2x4x256xf32>
    %c240_i32_97 = arith.constant 240 : i32
    %261 = tpu.dynamic_rotate %189 by %c240_i32_97 dim 2 : vector<2x4x256xf32>, i32 -> vector<2x4x256xf32>
    %cst_98 = arith.constant 0.000000e+00 : f32
    %262 = vector.shape_cast %8 : vector<1x1x256xi1> to vector<1x1x256xi1>
    %263 = vector.broadcast %262 : vector<1x1x256xi1> to vector<2x4x256xi1>
    %264 = vector.broadcast %cst_98 : f32 to vector<2x4x256xf32>
    %265 = arith.select %263, %261, %264 : vector<2x4x256xi1>, vector<2x4x256xf32>
    %c7_99 = arith.constant 7 : index
    %c0_100 = arith.constant 0 : index
    %c0_101 = arith.constant 0 : index
    %266 = vector.load %arg9[%c7_99, %c0_100, %c0_101] : memref<9x4x1xf32, #tpu.memory_space<vmem>>, vector<1x4x1xf32>
    %267 = vector.shape_cast %266 : vector<1x4x1xf32> to vector<4x1xf32>
    %268 = vector.shape_cast %267 : vector<4x1xf32> to vector<1x4x1xf32>
    %269 = vector.broadcast %268 : vector<1x4x1xf32> to vector<2x4x256xf32>
    %270 = arith.mulf %265, %269 : vector<2x4x256xf32>
    %271 = arith.addf %260, %270 : vector<2x4x256xf32>
    %c239_i32_102 = arith.constant 239 : i32
    %272 = tpu.dynamic_rotate %189 by %c239_i32_102 dim 2 : vector<2x4x256xf32>, i32 -> vector<2x4x256xf32>
    %cst_103 = arith.constant 0.000000e+00 : f32
    %273 = vector.shape_cast %16 : vector<1x1x256xi1> to vector<1x1x256xi1>
    %274 = vector.broadcast %273 : vector<1x1x256xi1> to vector<2x4x256xi1>
    %275 = vector.broadcast %cst_103 : f32 to vector<2x4x256xf32>
    %276 = arith.select %274, %272, %275 : vector<2x4x256xi1>, vector<2x4x256xf32>
    %c8_104 = arith.constant 8 : index
    %c0_105 = arith.constant 0 : index
    %c0_106 = arith.constant 0 : index
    %277 = vector.load %arg9[%c8_104, %c0_105, %c0_106] : memref<9x4x1xf32, #tpu.memory_space<vmem>>, vector<1x4x1xf32>
    %278 = vector.shape_cast %277 : vector<1x4x1xf32> to vector<4x1xf32>
    %279 = vector.shape_cast %278 : vector<4x1xf32> to vector<1x4x1xf32>
    %280 = vector.broadcast %279 : vector<1x4x1xf32> to vector<2x4x256xf32>
    %281 = arith.mulf %276, %280 : vector<2x4x256xf32>
    %282 = arith.addf %271, %281 : vector<2x4x256xf32>
    %c0_107 = arith.constant 0 : index
    %c0_108 = arith.constant 0 : index
    %283 = vector.load %arg10[%c0_107, %c0_108] : memref<4x1xf32, #tpu.memory_space<vmem>>, vector<4x1xf32>
    %284 = vector.shape_cast %283 : vector<4x1xf32> to vector<1x4x1xf32>
    %285 = vector.broadcast %284 : vector<1x4x1xf32> to vector<2x4x256xf32>
    %286 = arith.addf %282, %285 : vector<2x4x256xf32>
    %c0_109 = arith.constant 0 : index
    %c0_110 = arith.constant 0 : index
    %c0_111 = arith.constant 0 : index
    %287 = vector.load %arg11[%c0_109, %c0_110, %c0_111] : memref<8x4x1xf32, #tpu.memory_space<vmem>>, vector<8x4x1xf32>
    %288 = vector.shape_cast %286 : vector<2x4x256xf32> to vector<2x1x4x256xf32>
    %289 = vector.shape_cast %287 : vector<8x4x1xf32> to vector<1x8x4x1xf32>
    %290 = vector.broadcast %288 : vector<2x1x4x256xf32> to vector<2x8x4x256xf32>
    %291 = vector.broadcast %289 : vector<1x8x4x1xf32> to vector<2x8x4x256xf32>
    %292 = arith.mulf %290, %291 : vector<2x8x4x256xf32>
    %cst_112 = arith.constant dense<0.000000e+00> : vector<2x8x256xf32>
    %293 = vector.multi_reduction <add>, %292, %cst_112 [2] : vector<2x8x4x256xf32> to vector<2x8x256xf32>
    %c0_113 = arith.constant 0 : index
    %c0_114 = arith.constant 0 : index
    %294 = vector.load %arg12[%c0_113, %c0_114] : memref<8x1xf32, #tpu.memory_space<vmem>>, vector<8x1xf32>
    %295 = vector.shape_cast %294 : vector<8x1xf32> to vector<1x8x1xf32>
    %296 = vector.broadcast %295 : vector<1x8x1xf32> to vector<2x8x256xf32>
    %297 = arith.addf %293, %296 : vector<2x8x256xf32>
    %c0_115 = arith.constant 0 : index
    %c0_116 = arith.constant 0 : index
    %c0_117 = arith.constant 0 : index
    %298 = vector.load %arg13[%c0_115, %c0_116, %c0_117] : memref<2x8x256xf32, #tpu.memory_space<vmem>>, vector<2x8x256xf32>
    tpu.vector_store %arg13[%c0_115, %c0_116, %c0_117], %297 {strides = array<i32>} : memref<2x8x256xf32, #tpu.memory_space<vmem>>, vector<2x8x256xf32>,
    return
  }
}

</mosaic_0001>

<llo_original>
// kernel: conv_block_forward.1
$region0: #{conv_block_forward.1}
  #allocation0 [shape = 'u32[]', space=smem, size = 0x4, offset = 0x4, fixed_abs, tag = 'smem constant byte address 0x4 - core index']
  #allocation1 [shape = 'u32[144,128]{1,0:T(1,128)}', space=vmem, size = 0x12000, scoped, tag = 'internal scratch']
  %s0 = inlined_call_operand.vmem [shape: f32[2,8,256], index: 0, kind: input, shape index: {}]
  %s1 = inlined_call_operand.vmem [shape: f32[8,1], index: 1, kind: input, shape index: {}]
  %s2 = inlined_call_operand.vmem [shape: f32[8,1], index: 2, kind: input, shape index: {}]
  %s3 = inlined_call_operand.vmem [shape: f32[9,8,1], index: 3, kind: input, shape index: {}]
  %s4 = inlined_call_operand.vmem [shape: f32[8,1], index: 4, kind: input, shape index: {}]
  %s5 = inlined_call_operand.vmem [shape: f32[4,8,1], index: 5, kind: input, shape index: {}]
  %s6 = inlined_call_operand.vmem [shape: f32[4,1], index: 6, kind: input, shape index: {}]
  %s7 = inlined_call_operand.vmem [shape: f32[4,1], index: 7, kind: input, shape index: {}]
  %s8 = inlined_call_operand.vmem [shape: f32[4,1], index: 8, kind: input, shape index: {}]
  %s9 = inlined_call_operand.vmem [shape: f32[9,4,1], index: 9, kind: input, shape index: {}]
  %s10 = inlined_call_operand.vmem [shape: f32[4,1], index: 10, kind: input, shape index: {}]
  %s11 = inlined_call_operand.vmem [shape: f32[8,4,1], index: 11, kind: input, shape index: {}]
  %s12 = inlined_call_operand.vmem [shape: f32[8,1], index: 12, kind: input, shape index: {}]
  %s13 = inlined_call_operand.vmem [shape: f32[2,8,256], index: 13, kind: output, shape index: {}]
  %s14 = sld [smem:[#allocation0]]
  $region62: #{conv_block_forward.1} parent=0
    _
  %s16 = ssub.s32 1, %s14
  %s17 = scalar_select 0, %s16, %s14
  // Predicated region
  $region2: #{conv_block_forward.1} parent=0 // pred_check
    _
  $region3: #{conv_block_forward.1} parent=0 // pred_check_branch
    %19 = sbr.rel (0) target = $region5
  $region4: #{conv_block_forward.1} parent=0 // pred_region
    _
  $region5: #{conv_block_forward.1} parent=0 // pred_fallthru
    _
  // Predicated region
  $region6: #{conv_block_forward.1} parent=0 // pred_check
    _
  $region7: #{conv_block_forward.1} parent=0 // pred_check_branch
    %21 = sbr.rel (0) target = $region9
  $region8: #{conv_block_forward.1} parent=0 // pred_region
    _
  $region9: #{conv_block_forward.1} parent=0 // pred_fallthru
    _
  // Predicated region
  $region10: #{conv_block_forward.1} parent=0 // pred_check
    _
  $region11: #{conv_block_forward.1} parent=0 // pred_check_branch
    %23 = sbr.rel (0) target = $region13
  $region12: #{conv_block_forward.1} parent=0 // pred_region
    _
  $region13: #{conv_block_forward.1} parent=0 // pred_fallthru
    _
  // Predicated region
  $region14: #{conv_block_forward.1} parent=0 // pred_check
    _
  $region15: #{conv_block_forward.1} parent=0 // pred_check_branch
    %25 = sbr.rel (0) target = $region17
  $region16: #{conv_block_forward.1} parent=0 // pred_region
    _
  $region17: #{conv_block_forward.1} parent=0 // pred_fallthru
    _
  // Predicated region
  $region18: #{conv_block_forward.1} parent=0 // pred_check
    _
  $region19: #{conv_block_forward.1} parent=0 // pred_check_branch
    %27 = sbr.rel (0) target = $region21
  $region20: #{conv_block_forward.1} parent=0 // pred_region
    _
  $region21: #{conv_block_forward.1} parent=0 // pred_fallthru
    _
  // Predicated region
  $region22: #{conv_block_forward.1} parent=0 // pred_check
    _
  $region23: #{conv_block_forward.1} parent=0 // pred_check_branch
    %29 = sbr.rel (0) target = $region25
  $region24: #{conv_block_forward.1} parent=0 // pred_region
    _
  $region25: #{conv_block_forward.1} parent=0 // pred_fallthru
    _
  // Predicated region
  $region26: #{conv_block_forward.1} parent=0 // pred_check
    _
  $region27: #{conv_block_forward.1} parent=0 // pred_check_branch
    %31 = sbr.rel (0) target = $region29
  $region28: #{conv_block_forward.1} parent=0 // pred_region
    _
  $region29: #{conv_block_forward.1} parent=0 // pred_fallthru
    _
  // Predicated region
  $region30: #{conv_block_forward.1} parent=0 // pred_check
    _
  $region31: #{conv_block_forward.1} parent=0 // pred_check_branch
    %33 = sbr.rel (0) target = $region33
  $region32: #{conv_block_forward.1} parent=0 // pred_region
    _
  $region33: #{conv_block_forward.1} parent=0 // pred_fallthru
    _
  // Predicated region
  $region34: #{conv_block_forward.1} parent=0 // pred_check
    _
  $region35: #{conv_block_forward.1} parent=0 // pred_check_branch
    %35 = sbr.rel (0) target = $region37
  $region36: #{conv_block_forward.1} parent=0 // pred_region
    _
  $region37: #{conv_block_forward.1} parent=0 // pred_fallthru
    _
  // Predicated region
  $region38: #{conv_block_forward.1} parent=0 // pred_check
    _
  $region39: #{conv_block_forward.1} parent=0 // pred_check_branch
    %37 = sbr.rel (0) target = $region41
  $region40: #{conv_block_forward.1} parent=0 // pred_region
    _
  $region41: #{conv_block_forward.1} parent=0 // pred_fallthru
    _
  // Predicated region
  $region42: #{conv_block_forward.1} parent=0 // pred_check
    _
  $region43: #{conv_block_forward.1} parent=0 // pred_check_branch
    %39 = sbr.rel (0) target = $region45
  $region44: #{conv_block_forward.1} parent=0 // pred_region
    _
  $region45: #{conv_block_forward.1} parent=0 // pred_fallthru
    _
  // Predicated region
  $region46: #{conv_block_forward.1} parent=0 // pred_check
    _
  $region47: #{conv_block_forward.1} parent=0 // pred_check_branch
    %41 = sbr.rel (0) target = $region49
  $region48: #{conv_block_forward.1} parent=0 // pred_region
    _
  $region49: #{conv_block_forward.1} parent=0 // pred_fallthru
    _
  // Predicated region
  $region50: #{conv_block_forward.1} parent=0 // pred_check
    _
  $region51: #{conv_block_forward.1} parent=0 // pred_check_branch
    %43 = sbr.rel (0) target = $region53
  $region52: #{conv_block_forward.1} parent=0 // pred_region
    _
  $region53: #{conv_block_forward.1} parent=0 // pred_fallthru
    _
  %v44 = vlaneseq
  %v45 = vand.u32 %v44, 127
  %v46 = vadd.s32 %v45, 128
  %v47 = vshra.s32 %v45, 4
  %v48 = vshra.s32 %v46, 4
  %v49 = vand.u32 %v45, 15
  %v50 = vand.u32 %v46, 15
  %vm51 = vcmp.ge.s32.totalorder %v47, 1
  %vm52 = vcmp.ge.s32.totalorder %v48, 1
  %vm53 = vcmp.le.s32.totalorder %v47, 14
  %vm54 = vcmp.le.s32.totalorder %v48, 14
  %vm55 = vcmp.ge.s32.totalorder %v49, 1
  %vm56 = vcmp.ge.s32.totalorder %v50, 1
  %vm57 = vcmp.le.s32.totalorder %v49, 14
  %vm58 = vcmp.le.s32.totalorder %v50, 14
  %vm59 = vmand %vm51, %vm55
  %vm60 = vmand %vm52, %vm56
  %vm61 = vmand %vm51, %vm57
  %vm62 = vmand %vm52, %vm58
  %vm63 = vmand %vm53, %vm55
  %vm64 = vmand %vm54, %vm56
  %vm65 = vmand %vm53, %vm57
  %vm66 = vmand %vm54, %vm58
  %v67 = vld [vmem:[%s0] sm:$0xff]
  %v68 = vld [vmem:[%s0 + $0x8] sm:$0xff]
  %v69 = vld [vmem:[%s0 + $0x10] sm:$0xff]
  %v70 = vld [vmem:[%s0 + $0x18] sm:$0xff]
  %v71 = vadd.f32 %v67, %v68
  %72 = vadd.xlane.f32.xlu0 %v71
  %v73 = vpop.xlane.xlu0 %72
  %v74 = vadd.f32 %v69, %v70
  %75 = vadd.xlane.f32.xlu0 %v74
  %v76 = vpop.xlane.xlu0 %75
  %v77 = vadd.f32 %v73, %v76
  %v78 = vmul.f32 %v67, %v67
  %v79 = vmul.f32 %v68, %v68
  %v80 = vmul.f32 %v69, %v69
  %v81 = vmul.f32 %v70, %v70
  %v82 = vadd.f32 %v78, %v79
  %83 = vadd.xlane.f32.xlu0 %v82
  %v84 = vpop.xlane.xlu0 %83
  %v85 = vadd.f32 %v80, %v81
  %86 = vadd.xlane.f32.xlu0 %v85
  %v87 = vpop.xlane.xlu0 %86
  %v88 = vadd.f32 %v84, %v87
  %v89 = vmul.f32 %v77, 0.001953125
  %v90 = vmul.f32 %v88, 0.001953125
  %v91 = vmul.f32 %v89, %v89
  %v92 = vsub.f32 %v90, %v91
  %v93 = vsub.f32 %v67, %v89
  %v94 = vsub.f32 %v68, %v89
  %v95 = vsub.f32 %v69, %v89
  %v96 = vsub.f32 %v70, %v89
  %v97 = vadd.f32 %v92, 1e-05
  %v98 = vrsqrt.pop %v97
  %v99 = vmul.f32 %v93, %v98
  %v100 = vmul.f32 %v94, %v98
  %v101 = vmul.f32 %v95, %v98
  %v102 = vmul.f32 %v96, %v98
  %v103 = vld [vmem:[%s1] sm:$0xff]
  %105 = vset.pattern.permute.xlu0 0
  %106 = vperm.xlu0 %105, %v103
  %v107 = vpop.permute.xlu0 %106
  %v109 = vmul.f32 %v99, %v107
  %v110 = vmul.f32 %v100, %v107
  %v111 = vmul.f32 %v101, %v107
  %v112 = vmul.f32 %v102, %v107
  %v113 = vld [vmem:[%s2] sm:$0xff]
  %115 = vset.pattern.permute.xlu0 0
  %116 = vperm.xlu0 %115, %v113
  %v117 = vpop.permute.xlu0 %116
  %v119 = vadd.f32 %v109, %v117
  %v120 = vadd.f32 %v110, %v117
  %v121 = vadd.f32 %v111, %v117
  %v122 = vadd.f32 %v112, %v117
  %v123 = vmax.f32 %v119, 0.0
  %v124 = vmax.f32 %v120, 0.0
  %v125 = vmax.f32 %v121, 0.0
  %v126 = vmax.f32 %v122, 0.0
  %127 = vrot.lane.b32.xlu0 %v123, 17
  %v128 = vpop.permute.xlu0 %127
  %129 = vrot.lane.b32.xlu0 %v125, 17
  %v130 = vpop.permute.xlu0 %129
  %131 = vrot.lane.b32.xlu0 %v124, 17
  %v132 = vpop.permute.xlu0 %131
  %133 = vrot.lane.b32.xlu0 %v126, 17
  %v134 = vpop.permute.xlu0 %133
  %vm135 = vcmp.lt.s32.totalorder %v45, 17
  %v136 = vsel %vm135, %v128, %v132
  %v137 = vsel %vm135, %v130, %v134
  %v138 = vsel %vm135, %v132, %v128
  %v139 = vsel %vm135, %v134, %v130
  %v140 = vsel %vm59, 1, 0
  %v141 = vsel %vm60, 1, 0
  %vm142 = vcmp.eq.s32.totalorder %v140, 1
  %vm143 = vcmp.eq.s32.totalorder %v141, 1
  %v144 = vsel %vm142, %v138, 0.0
  %v145 = vsel %vm143, %v136, 0.0
  %v146 = vsel %vm142, %v139, 0.0
  %v147 = vsel %vm143, %v137, 0.0
  %v148 = vld [vmem:[%s3] sm:$0xff]
  %150 = vset.pattern.permute.xlu0 0
  %151 = vperm.xlu0 %150, %v148
  %v152 = vpop.permute.xlu0 %151
  %v154 = vmul.f32 %v144, %v152
  %v155 = vmul.f32 %v145, %v152
  %v156 = vmul.f32 %v146, %v152
  %v157 = vmul.f32 %v147, %v152
  %158 = vrot.lane.b32.xlu0 %v123, 16
  %v159 = vpop.permute.xlu0 %158
  %160 = vrot.lane.b32.xlu0 %v125, 16
  %v161 = vpop.permute.xlu0 %160
  %162 = vrot.lane.b32.xlu0 %v124, 16
  %v163 = vpop.permute.xlu0 %162
  %164 = vrot.lane.b32.xlu0 %v126, 16
  %v165 = vpop.permute.xlu0 %164
  %vm166 = vcmp.lt.s32.totalorder %v45, 16
  %v167 = vsel %vm166, %v159, %v163
  %v168 = vsel %vm166, %v161, %v165
  %v169 = vsel %vm166, %v163, %v159
  %v170 = vsel %vm166, %v165, %v161
  %v171 = vsel %vm51, 1, 0
  %v172 = vsel %vm52, 1, 0
  %vm173 = vcmp.eq.s32.totalorder %v171, 1
  %vm174 = vcmp.eq.s32.totalorder %v172, 1
  %v175 = vsel %vm173, %v169, 0.0
  %v176 = vsel %vm174, %v167, 0.0
  %v177 = vsel %vm173, %v170, 0.0
  %v178 = vsel %vm174, %v168, 0.0
  %s179 = scalar_lea.vmem %s3, 8
  %v180 = vld [vmem:[%s179] sm:$0xff]
  %182 = vset.pattern.permute.xlu0 0
  %183 = vperm.xlu0 %182, %v180
  %v184 = vpop.permute.xlu0 %183
  %v186 = vmul.f32 %v175, %v184
  %v187 = vmul.f32 %v176, %v184
  %v188 = vmul.f32 %v177, %v184
  %v189 = vmul.f32 %v178, %v184
  %v190 = vadd.f32 %v154, %v186
  %v191 = vadd.f32 %v155, %v187
  %v192 = vadd.f32 %v156, %v188
  %v193 = vadd.f32 %v157, %v189
  %194 = vrot.lane.b32.xlu0 %v123, 15
  %v195 = vpop.permute.xlu0 %194
  %196 = vrot.lane.b32.xlu0 %v125, 15
  %v197 = vpop.permute.xlu0 %196
  %198 = vrot.lane.b32.xlu0 %v124, 15
  %v199 = vpop.permute.xlu0 %198
  %200 = vrot.lane.b32.xlu0 %v126, 15
  %v201 = vpop.permute.xlu0 %200
  %vm202 = vcmp.lt.s32.totalorder %v45, 15
  %v203 = vsel %vm202, %v195, %v199
  %v204 = vsel %vm202, %v197, %v201
  %v205 = vsel %vm202, %v199, %v195
  %v206 = vsel %vm202, %v201, %v197
  %v207 = vsel %vm61, 1, 0
  %v208 = vsel %vm62, 1, 0
  %vm209 = vcmp.eq.s32.totalorder %v207, 1
  %vm210 = vcmp.eq.s32.totalorder %v208, 1
  %v211 = vsel %vm209, %v205, 0.0
  %v212 = vsel %vm210, %v203, 0.0
  %v213 = vsel %vm209, %v206, 0.0
  %v214 = vsel %vm210, %v204, 0.0
  %s215 = scalar_lea.vmem %s3, 16
  %v216 = vld [vmem:[%s215] sm:$0xff]
  %218 = vset.pattern.permute.xlu0 0
  %219 = vperm.xlu0 %218, %v216
  %v220 = vpop.permute.xlu0 %219
  %v222 = vmul.f32 %v211, %v220
  %v223 = vmul.f32 %v212, %v220
  %v224 = vmul.f32 %v213, %v220
  %v225 = vmul.f32 %v214, %v220
  %v226 = vadd.f32 %v190, %v222
  %v227 = vadd.f32 %v191, %v223
  %v228 = vadd.f32 %v192, %v224
  %v229 = vadd.f32 %v193, %v225
  %230 = vrot.lane.b32.xlu0 %v123, 1
  %v231 = vpop.permute.xlu0 %230
  %232 = vrot.lane.b32.xlu0 %v125, 1
  %v233 = vpop.permute.xlu0 %232
  %234 = vrot.lane.b32.xlu0 %v124, 1
  %v235 = vpop.permute.xlu0 %234
  %236 = vrot.lane.b32.xlu0 %v126, 1
  %v237 = vpop.permute.xlu0 %236
  %vm238 = vcmp.lt.s32.totalorder %v45, 1
  %v239 = vsel %vm238, %v231, %v235
  %v240 = vsel %vm238, %v233, %v237
  %v241 = vsel %vm238, %v235, %v231
  %v242 = vsel %vm238, %v237, %v233
  %v243 = vsel %vm55, 1, 0
  %v244 = vsel %vm56, 1, 0
  %vm245 = vcmp.eq.s32.totalorder %v243, 1
  %vm246 = vcmp.eq.s32.totalorder %v244, 1
  %v247 = vsel %vm245, %v241, 0.0
  %v248 = vsel %vm246, %v239, 0.0
  %v249 = vsel %vm245, %v242, 0.0
  %v250 = vsel %vm246, %v240, 0.0
  %s251 = scalar_lea.vmem %s3, 24
  %v252 = vld [vmem:[%s251] sm:$0xff]
  %254 = vset.pattern.permute.xlu0 0
  %255 = vperm.xlu0 %254, %v252
  %v256 = vpop.permute.xlu0 %255
  %v258 = vmul.f32 %v247, %v256
  %v259 = vmul.f32 %v248, %v256
  %v260 = vmul.f32 %v249, %v256
  %v261 = vmul.f32 %v250, %v256
  %v262 = vadd.f32 %v226, %v258
  %v263 = vadd.f32 %v227, %v259
  %v264 = vadd.f32 %v228, %v260
  %v265 = vadd.f32 %v229, %v261
  %s266 = scalar_lea.vmem %s3, 32
  %v267 = vld [vmem:[%s266] sm:$0xff]
  %269 = vset.pattern.permute.xlu0 0
  %270 = vperm.xlu0 %269, %v267
  %v271 = vpop.permute.xlu0 %270
  %v273 = vmul.f32 %v123, %v271
  %v274 = vmul.f32 %v124, %v271
  %v275 = vmul.f32 %v125, %v271
  %v276 = vmul.f32 %v126, %v271
  %v277 = vadd.f32 %v262, %v273
  %v278 = vadd.f32 %v263, %v274
  %v279 = vadd.f32 %v264, %v275
  %v280 = vadd.f32 %v265, %v276
  %281 = vrot.lane.b32.xlu0 %v123, 127
  %v282 = vpop.permute.xlu0 %281
  %283 = vrot.lane.b32.xlu0 %v125, 127
  %v284 = vpop.permute.xlu0 %283
  %285 = vrot.lane.b32.xlu0 %v124, 127
  %v286 = vpop.permute.xlu0 %285
  %287 = vrot.lane.b32.xlu0 %v126, 127
  %v288 = vpop.permute.xlu0 %287
  %vm289 = vcmp.lt.s32.totalorder %v45, 127
  %v290 = vsel %vm289, %v282, %v286
  %v291 = vsel %vm289, %v284, %v288
  %v292 = vsel %vm289, %v286, %v282
  %v293 = vsel %vm289, %v288, %v284
  %v294 = vsel %vm57, 1, 0
  %v295 = vsel %vm58, 1, 0
  %vm296 = vcmp.eq.s32.totalorder %v294, 1
  %vm297 = vcmp.eq.s32.totalorder %v295, 1
  %v298 = vsel %vm296, %v290, 0.0
  %v299 = vsel %vm297, %v292, 0.0
  %v300 = vsel %vm296, %v291, 0.0
  %v301 = vsel %vm297, %v293, 0.0
  %s302 = scalar_lea.vmem %s3, 40
  %v303 = vld [vmem:[%s302] sm:$0xff]
  %305 = vset.pattern.permute.xlu0 0
  %306 = vperm.xlu0 %305, %v303
  %v307 = vpop.permute.xlu0 %306
  %v309 = vmul.f32 %v298, %v307
  %v310 = vmul.f32 %v299, %v307
  %v311 = vmul.f32 %v300, %v307
  %v312 = vmul.f32 %v301, %v307
  %v313 = vadd.f32 %v277, %v309
  %v314 = vadd.f32 %v278, %v310
  %v315 = vadd.f32 %v279, %v311
  %v316 = vadd.f32 %v280, %v312
  %317 = vrot.lane.b32.xlu0 %v123, 113
  %v318 = vpop.permute.xlu0 %317
  %319 = vrot.lane.b32.xlu0 %v125, 113
  %v320 = vpop.permute.xlu0 %319
  %321 = vrot.lane.b32.xlu0 %v124, 113
  %v322 = vpop.permute.xlu0 %321
  %323 = vrot.lane.b32.xlu0 %v126, 113
  %v324 = vpop.permute.xlu0 %323
  %vm325 = vcmp.lt.s32.totalorder %v45, 113
  %v326 = vsel %vm325, %v318, %v322
  %v327 = vsel %vm325, %v320, %v324
  %v328 = vsel %vm325, %v322, %v318
  %v329 = vsel %vm325, %v324, %v320
  %v330 = vsel %vm63, 1, 0
  %v331 = vsel %vm64, 1, 0
  %vm332 = vcmp.eq.s32.totalorder %v330, 1
  %vm333 = vcmp.eq.s32.totalorder %v331, 1
  %v334 = vsel %vm332, %v326, 0.0
  %v335 = vsel %vm333, %v328, 0.0
  %v336 = vsel %vm332, %v327, 0.0
  %v337 = vsel %vm333, %v329, 0.0
  %s338 = scalar_lea.vmem %s3, 48
  %v339 = vld [vmem:[%s338] sm:$0xff]
  %341 = vset.pattern.permute.xlu0 0
  %342 = vperm.xlu0 %341, %v339
  %v343 = vpop.permute.xlu0 %342
  %v345 = vmul.f32 %v334, %v343
  %v346 = vmul.f32 %v335, %v343
  %v347 = vmul.f32 %v336, %v343
  %v348 = vmul.f32 %v337, %v343
  %v349 = vadd.f32 %v313, %v345
  %v350 = vadd.f32 %v314, %v346
  %v351 = vadd.f32 %v315, %v347
  %v352 = vadd.f32 %v316, %v348
  %353 = vrot.lane.b32.xlu0 %v123, 112
  %v354 = vpop.permute.xlu0 %353
  %355 = vrot.lane.b32.xlu0 %v125, 112
  %v356 = vpop.permute.xlu0 %355
  %357 = vrot.lane.b32.xlu0 %v124, 112
  %v358 = vpop.permute.xlu0 %357
  %359 = vrot.lane.b32.xlu0 %v126, 112
  %v360 = vpop.permute.xlu0 %359
  %vm361 = vcmp.lt.s32.totalorder %v45, 112
  %v362 = vsel %vm361, %v354, %v358
  %v363 = vsel %vm361, %v356, %v360
  %v364 = vsel %vm361, %v358, %v354
  %v365 = vsel %vm361, %v360, %v356
  %v366 = vsel %vm53, 1, 0
  %v367 = vsel %vm54, 1, 0
  %vm368 = vcmp.eq.s32.totalorder %v366, 1
  %vm369 = vcmp.eq.s32.totalorder %v367, 1
  %v370 = vsel %vm368, %v362, 0.0
  %v371 = vsel %vm369, %v364, 0.0
  %v372 = vsel %vm368, %v363, 0.0
  %v373 = vsel %vm369, %v365, 0.0
  %s374 = scalar_lea.vmem %s3, 56
  %v375 = vld [vmem:[%s374] sm:$0xff]
  %377 = vset.pattern.permute.xlu0 0
  %378 = vperm.xlu0 %377, %v375
  %v379 = vpop.permute.xlu0 %378
  %v381 = vmul.f32 %v370, %v379
  %v382 = vmul.f32 %v371, %v379
  %v383 = vmul.f32 %v372, %v379
  %v384 = vmul.f32 %v373, %v379
  %v385 = vadd.f32 %v349, %v381
  %v386 = vadd.f32 %v350, %v382
  %v387 = vadd.f32 %v351, %v383
  %v388 = vadd.f32 %v352, %v384
  %389 = vrot.lane.b32.xlu0 %v123, 111
  %v390 = vpop.permute.xlu0 %389
  %391 = vrot.lane.b32.xlu0 %v125, 111
  %v392 = vpop.permute.xlu0 %391
  %393 = vrot.lane.b32.xlu0 %v124, 111
  %v394 = vpop.permute.xlu0 %393
  %395 = vrot.lane.b32.xlu0 %v126, 111
  %v396 = vpop.permute.xlu0 %395
  %vm397 = vcmp.lt.s32.totalorder %v45, 111
  %v398 = vsel %vm397, %v390, %v394
  %v399 = vsel %vm397, %v392, %v396
  %v400 = vsel %vm397, %v394, %v390
  %v401 = vsel %vm397, %v396, %v392
  %v402 = vsel %vm65, 1, 0
  %v403 = vsel %vm66, 1, 0
  %vm404 = vcmp.eq.s32.totalorder %v402, 1
  %vm405 = vcmp.eq.s32.totalorder %v403, 1
  %v406 = vsel %vm404, %v398, 0.0
  %v407 = vsel %vm405, %v400, 0.0
  %v408 = vsel %vm404, %v399, 0.0
  %v409 = vsel %vm405, %v401, 0.0
  %s410 = scalar_lea.vmem %s3, 64
  %v411 = vld [vmem:[%s410] sm:$0xff]
  %413 = vset.pattern.permute.xlu0 0
  %414 = vperm.xlu0 %413, %v411
  %v415 = vpop.permute.xlu0 %414
  %v417 = vmul.f32 %v406, %v415
  %v418 = vmul.f32 %v407, %v415
  %v419 = vmul.f32 %v408, %v415
  %v420 = vmul.f32 %v409, %v415
  %v421 = vadd.f32 %v385, %v417
  %v422 = vadd.f32 %v386, %v418
  %v423 = vadd.f32 %v387, %v419
  %v424 = vadd.f32 %v388, %v420
  %v425 = vld [vmem:[%s4] sm:$0xff]
  %427 = vset.pattern.permute.xlu0 0
  %428 = vperm.xlu0 %427, %v425
  %v429 = vpop.permute.xlu0 %428
  %v431 = vadd.f32 %v421, %v429
  %v432 = vadd.f32 %v422, %v429
  %v433 = vadd.f32 %v423, %v429
  %v434 = vadd.f32 %v424, %v429
  %v435 = vld [vmem:[%s5] sm:$0xff]
  %v436 = vld [vmem:[%s5 + $0x8] sm:$0xff]
  %v437 = vld [vmem:[%s5 + $0x10] sm:$0xff]
  %v438 = vld [vmem:[%s5 + $0x18] sm:$0xff]
  %440 = vset.pattern.permute.xlu0 0
  %441 = vperm.xlu0 %440, %v435
  %v442 = vpop.permute.xlu0 %441
  %445 = vset.pattern.permute.xlu0 0
  %446 = vperm.xlu0 %445, %v436
  %v447 = vpop.permute.xlu0 %446
  %450 = vset.pattern.permute.xlu0 0
  %451 = vperm.xlu0 %450, %v437
  %v452 = vpop.permute.xlu0 %451
  %455 = vset.pattern.permute.xlu0 0
  %456 = vperm.xlu0 %455, %v438
  %v457 = vpop.permute.xlu0 %456
  %v459 = vmul.f32 %v431, %v442
  %v460 = vmul.f32 %v432, %v442
  %v461 = vmul.f32 %v431, %v447
  %v462 = vmul.f32 %v432, %v447
  %v463 = vmul.f32 %v431, %v452
  %v464 = vmul.f32 %v432, %v452
  %v465 = vmul.f32 %v431, %v457
  %v466 = vmul.f32 %v432, %v457
  %v467 = vmul.f32 %v433, %v442
  %v468 = vmul.f32 %v434, %v442
  %v469 = vmul.f32 %v433, %v447
  %v470 = vmul.f32 %v434, %v447
  %v471 = vmul.f32 %v433, %v452
  %v472 = vmul.f32 %v434, %v452
  %v473 = vmul.f32 %v433, %v457
  %v474 = vmul.f32 %v434, %v457
  %v475 = vrot.slane %v459, 4
  %v476 = vadd.f32 %v459, %v475
  %v477 = vrot.slane %v476, 2
  %v478 = vadd.f32 %v476, %v477
  %v479 = vrot.slane %v478, 1
  %v480 = vadd.f32 %v478, %v479
  %v481 = vrot.slane %v460, 4
  %v482 = vadd.f32 %v460, %v481
  %v483 = vrot.slane %v482, 2
  %v484 = vadd.f32 %v482, %v483
  %v485 = vrot.slane %v484, 1
  %v486 = vadd.f32 %v484, %v485
  %v487 = vrot.slane %v461, 4
  %v488 = vadd.f32 %v461, %v487
  %v489 = vrot.slane %v488, 2
  %v490 = vadd.f32 %v488, %v489
  %v491 = vrot.slane %v490, 1
  %v492 = vadd.f32 %v490, %v491
  %v493 = vrot.slane %v462, 4
  %v494 = vadd.f32 %v462, %v493
  %v495 = vrot.slane %v494, 2
  %v496 = vadd.f32 %v494, %v495
  %v497 = vrot.slane %v496, 1
  %v498 = vadd.f32 %v496, %v497
  %v499 = vrot.slane %v463, 4
  %v500 = vadd.f32 %v463, %v499
  %v501 = vrot.slane %v500, 2
  %v502 = vadd.f32 %v500, %v501
  %v503 = vrot.slane %v502, 1
  %v504 = vadd.f32 %v502, %v503
  %v505 = vrot.slane %v464, 4
  %v506 = vadd.f32 %v464, %v505
  %v507 = vrot.slane %v506, 2
  %v508 = vadd.f32 %v506, %v507
  %v509 = vrot.slane %v508, 1
  %v510 = vadd.f32 %v508, %v509
  %v511 = vrot.slane %v465, 4
  %v512 = vadd.f32 %v465, %v511
  %v513 = vrot.slane %v512, 2
  %v514 = vadd.f32 %v512, %v513
  %v515 = vrot.slane %v514, 1
  %v516 = vadd.f32 %v514, %v515
  %v517 = vrot.slane %v466, 4
  %v518 = vadd.f32 %v466, %v517
  %v519 = vrot.slane %v518, 2
  %v520 = vadd.f32 %v518, %v519
  %v521 = vrot.slane %v520, 1
  %v522 = vadd.f32 %v520, %v521
  %v523 = vrot.slane %v467, 4
  %v524 = vadd.f32 %v467, %v523
  %v525 = vrot.slane %v524, 2
  %v526 = vadd.f32 %v524, %v525
  %v527 = vrot.slane %v526, 1
  %v528 = vadd.f32 %v526, %v527
  %v529 = vrot.slane %v468, 4
  %v530 = vadd.f32 %v468, %v529
  %v531 = vrot.slane %v530, 2
  %v532 = vadd.f32 %v530, %v531
  %v533 = vrot.slane %v532, 1
  %v534 = vadd.f32 %v532, %v533
  %v535 = vrot.slane %v469, 4
  %v536 = vadd.f32 %v469, %v535
  %v537 = vrot.slane %v536, 2
  %v538 = vadd.f32 %v536, %v537
  %v539 = vrot.slane %v538, 1
  %v540 = vadd.f32 %v538, %v539
  %v541 = vrot.slane %v470, 4
  %v542 = vadd.f32 %v470, %v541
  %v543 = vrot.slane %v542, 2
  %v544 = vadd.f32 %v542, %v543
  %v545 = vrot.slane %v544, 1
  %v546 = vadd.f32 %v544, %v545
  %v547 = vrot.slane %v471, 4
  %v548 = vadd.f32 %v471, %v547
  %v549 = vrot.slane %v548, 2
  %v550 = vadd.f32 %v548, %v549
  %v551 = vrot.slane %v550, 1
  %v552 = vadd.f32 %v550, %v551
  %v553 = vrot.slane %v472, 4
  %v554 = vadd.f32 %v472, %v553
  %v555 = vrot.slane %v554, 2
  %v556 = vadd.f32 %v554, %v555
  %v557 = vrot.slane %v556, 1
  %v558 = vadd.f32 %v556, %v557
  %v559 = vrot.slane %v473, 4
  %v560 = vadd.f32 %v473, %v559
  %v561 = vrot.slane %v560, 2
  %v562 = vadd.f32 %v560, %v561
  %v563 = vrot.slane %v562, 1
  %v564 = vadd.f32 %v562, %v563
  %v565 = vrot.slane %v474, 4
  %v566 = vadd.f32 %v474, %v565
  %v567 = vrot.slane %v566, 2
  %v568 = vadd.f32 %v566, %v567
  %v569 = vrot.slane %v568, 1
  %v570 = vadd.f32 %v568, %v569
  %v571 = vld [vmem:[%s6] sm:$0xf]
  %573 = vset.pattern.permute.xlu0 0
  %574 = vperm.xlu0 %573, %v571
  %v575 = vpop.permute.xlu0 %574
  %v576 = vrot.slane %v575, 1
  %v577 = vrot.slane %v575, 2
  %v578 = vrot.slane %v575, 3
  %v583 = vadd.f32 %v480, %v575
  %v584 = vadd.f32 %v486, %v575
  %v585 = vadd.f32 %v492, %v576
  %v586 = vadd.f32 %v498, %v576
  %v587 = vadd.f32 %v504, %v577
  %v588 = vadd.f32 %v510, %v577
  %v589 = vadd.f32 %v516, %v578
  %v590 = vadd.f32 %v522, %v578
  %v591 = vadd.f32 %v528, %v575
  %v592 = vadd.f32 %v534, %v575
  %v593 = vadd.f32 %v540, %v576
  %v594 = vadd.f32 %v546, %v576
  %v595 = vadd.f32 %v552, %v577
  %v596 = vadd.f32 %v558, %v577
  %v597 = vadd.f32 %v564, %v578
  %v598 = vadd.f32 %v570, %v578
  %v615 = vrot.slane %v585, 7
  %vm616 = vcmask 1041409
  %v617 = vsel %vm616, %v615, %v583
  %v618 = vrot.slane %v587, 6
  %vm619 = vcmask 1042434
  %v620 = vsel %vm619, %v618, %v617
  %v621 = vrot.slane %v589, 5
  %vm622 = vcmask 1043459
  %v623 = vsel %vm622, %v621, %v620
  %v624 = vrot.slane %v586, 7
  %v625 = vsel %vm616, %v624, %v584
  %v626 = vrot.slane %v588, 6
  %v627 = vsel %vm619, %v626, %v625
  %v628 = vrot.slane %v590, 5
  %v629 = vsel %vm622, %v628, %v627
  %v630 = vrot.slane %v593, 7
  %v631 = vsel %vm616, %v630, %v591
  %v632 = vrot.slane %v595, 6
  %v633 = vsel %vm619, %v632, %v631
  %v634 = vrot.slane %v597, 5
  %v635 = vsel %vm622, %v634, %v633
  %v636 = vrot.slane %v594, 7
  %v637 = vsel %vm616, %v636, %v592
  %v638 = vrot.slane %v596, 6
  %v639 = vsel %vm619, %v638, %v637
  %v640 = vrot.slane %v598, 5
  %v641 = vsel %vm622, %v640, %v639
  %vm646 = vcmask 1043456
  %v647 = vsel %vm646, %v623, 0.0
  %v648 = vsel %vm646, %v629, 0.0
  %v649 = vadd.f32 %v647, %v648
  %650 = vadd.xlane.f32.xlu0 %v649
  %v651 = vpop.xlane.xlu0 %650
  %v652 = vsel %vm646, %v635, 0.0
  %v653 = vsel %vm646, %v641, 0.0
  %v654 = vadd.f32 %v652, %v653
  %655 = vadd.xlane.f32.xlu0 %v654
  %v656 = vpop.xlane.xlu0 %655
  %v657 = vsel %vm646, %v651, 0.0
  %v658 = vsel %vm646, %v656, 0.0
  %v659 = vadd.f32 %v657, %v658
  %v660 = vmul.f32 %v583, %v583
  %v661 = vmul.f32 %v584, %v584
  %v662 = vmul.f32 %v585, %v585
  %v663 = vmul.f32 %v586, %v586
  %v664 = vmul.f32 %v587, %v587
  %v665 = vmul.f32 %v588, %v588
  %v666 = vmul.f32 %v589, %v589
  %v667 = vmul.f32 %v590, %v590
  %v668 = vmul.f32 %v591, %v591
  %v669 = vmul.f32 %v592, %v592
  %v670 = vmul.f32 %v593, %v593
  %v671 = vmul.f32 %v594, %v594
  %v672 = vmul.f32 %v595, %v595
  %v673 = vmul.f32 %v596, %v596
  %v674 = vmul.f32 %v597, %v597
  %v675 = vmul.f32 %v598, %v598
  %v692 = vrot.slane %v662, 7
  %v693 = vsel %vm616, %v692, %v660
  %v694 = vrot.slane %v664, 6
  %v695 = vsel %vm619, %v694, %v693
  %v696 = vrot.slane %v666, 5
  %v697 = vsel %vm622, %v696, %v695
  %v698 = vrot.slane %v663, 7
  %v699 = vsel %vm616, %v698, %v661
  %v700 = vrot.slane %v665, 6
  %v701 = vsel %vm619, %v700, %v699
  %v702 = vrot.slane %v667, 5
  %v703 = vsel %vm622, %v702, %v701
  %v704 = vrot.slane %v670, 7
  %v705 = vsel %vm616, %v704, %v668
  %v706 = vrot.slane %v672, 6
  %v707 = vsel %vm619, %v706, %v705
  %v708 = vrot.slane %v674, 5
  %v709 = vsel %vm622, %v708, %v707
  %v710 = vrot.slane %v671, 7
  %v711 = vsel %vm616, %v710, %v669
  %v712 = vrot.slane %v673, 6
  %v713 = vsel %vm619, %v712, %v711
  %v714 = vrot.slane %v675, 5
  %v715 = vsel %vm622, %v714, %v713
  %v720 = vsel %vm646, %v697, 0.0
  %v721 = vsel %vm646, %v703, 0.0
  %v722 = vadd.f32 %v720, %v721
  %723 = vadd.xlane.f32.xlu0 %v722
  %v724 = vpop.xlane.xlu0 %723
  %v725 = vsel %vm646, %v709, 0.0
  %v726 = vsel %vm646, %v715, 0.0
  %v727 = vadd.f32 %v725, %v726
  %728 = vadd.xlane.f32.xlu0 %v727
  %v729 = vpop.xlane.xlu0 %728
  %v730 = vsel %vm646, %v724, 0.0
  %v731 = vsel %vm646, %v729, 0.0
  %v732 = vadd.f32 %v730, %v731
  %v733 = vmul.f32 %v659, 0.001953125
  %v734 = vmul.f32 %v732, 0.001953125
  %v735 = vmul.f32 %v733, %v733
  %v736 = vsub.f32 %v734, %v735
  %v738 = vrot.slane %v733, 1
  %v739 = vrot.slane %v733, 2
  %v740 = vrot.slane %v733, 3
  %v745 = vsub.f32 %v583, %v733
  %v746 = vsub.f32 %v584, %v733
  %v747 = vsub.f32 %v585, %v738
  %v748 = vsub.f32 %v586, %v738
  %v749 = vsub.f32 %v587, %v739
  %v750 = vsub.f32 %v588, %v739
  %v751 = vsub.f32 %v589, %v740
  %v752 = vsub.f32 %v590, %v740
  %v753 = vsub.f32 %v591, %v733
  %v754 = vsub.f32 %v592, %v733
  %v755 = vsub.f32 %v593, %v738
  %v756 = vsub.f32 %v594, %v738
  %v757 = vsub.f32 %v595, %v739
  %v758 = vsub.f32 %v596, %v739
  %v759 = vsub.f32 %v597, %v740
  %v760 = vsub.f32 %v598, %v740
  %v761 = vadd.f32 %v736, 1e-05
  %v762 = vrsqrt.pop %v761
  %v764 = vrot.slane %v762, 1
  %v765 = vrot.slane %v762, 2
  %v766 = vrot.slane %v762, 3
  %v771 = vmul.f32 %v745, %v762
  %v772 = vmul.f32 %v746, %v762
  %v773 = vmul.f32 %v747, %v764
  %v774 = vmul.f32 %v748, %v764
  %v775 = vmul.f32 %v749, %v765
  %v776 = vmul.f32 %v750, %v765
  %v777 = vmul.f32 %v751, %v766
  %v778 = vmul.f32 %v752, %v766
  %v779 = vmul.f32 %v753, %v762
  %v780 = vmul.f32 %v754, %v762
  %v781 = vmul.f32 %v755, %v764
  %v782 = vmul.f32 %v756, %v764
  %v783 = vmul.f32 %v757, %v765
  %v784 = vmul.f32 %v758, %v765
  %v785 = vmul.f32 %v759, %v766
  %v786 = vmul.f32 %v760, %v766
  %v787 = vld [vmem:[%s7] sm:$0xf]
  %789 = vset.pattern.permute.xlu0 0
  %790 = vperm.xlu0 %789, %v787
  %v791 = vpop.permute.xlu0 %790
  %v792 = vrot.slane %v791, 1
  %v793 = vrot.slane %v791, 2
  %v794 = vrot.slane %v791, 3
  %v799 = vmul.f32 %v771, %v791
  %v800 = vmul.f32 %v772, %v791
  %v801 = vmul.f32 %v773, %v792
  %v802 = vmul.f32 %v774, %v792
  %v803 = vmul.f32 %v775, %v793
  %v804 = vmul.f32 %v776, %v793
  %v805 = vmul.f32 %v777, %v794
  %v806 = vmul.f32 %v778, %v794
  %v807 = vmul.f32 %v779, %v791
  %v808 = vmul.f32 %v780, %v791
  %v809 = vmul.f32 %v781, %v792
  %v810 = vmul.f32 %v782, %v792
  %v811 = vmul.f32 %v783, %v793
  %v812 = vmul.f32 %v784, %v793
  %v813 = vmul.f32 %v785, %v794
  %v814 = vmul.f32 %v786, %v794
  %v815 = vld [vmem:[%s8] sm:$0xf]
  %817 = vset.pattern.permute.xlu0 0
  %818 = vperm.xlu0 %817, %v815
  %v819 = vpop.permute.xlu0 %818
  %v820 = vrot.slane %v819, 1
  %v821 = vrot.slane %v819, 2
  %v822 = vrot.slane %v819, 3
  %v827 = vadd.f32 %v799, %v819
  %v828 = vadd.f32 %v800, %v819
  %v829 = vadd.f32 %v801, %v820
  %v830 = vadd.f32 %v802, %v820
  %v831 = vadd.f32 %v803, %v821
  %v832 = vadd.f32 %v804, %v821
  %v833 = vadd.f32 %v805, %v822
  %v834 = vadd.f32 %v806, %v822
  %v835 = vadd.f32 %v807, %v819
  %v836 = vadd.f32 %v808, %v819
  %v837 = vadd.f32 %v809, %v820
  %v838 = vadd.f32 %v810, %v820
  %v839 = vadd.f32 %v811, %v821
  %v840 = vadd.f32 %v812, %v821
  %v841 = vadd.f32 %v813, %v822
  %v842 = vadd.f32 %v814, %v822
  %v843 = vmax.f32 %v827, 0.0
  %v844 = vmax.f32 %v828, 0.0
  %v845 = vmax.f32 %v829, 0.0
  %v846 = vmax.f32 %v830, 0.0
  %v847 = vmax.f32 %v831, 0.0
  %v848 = vmax.f32 %v832, 0.0
  %v849 = vmax.f32 %v833, 0.0
  %v850 = vmax.f32 %v834, 0.0
  %v851 = vmax.f32 %v835, 0.0
  %v852 = vmax.f32 %v836, 0.0
  %v853 = vmax.f32 %v837, 0.0
  %v854 = vmax.f32 %v838, 0.0
  %v855 = vmax.f32 %v839, 0.0
  %v856 = vmax.f32 %v840, 0.0
  %v857 = vmax.f32 %v841, 0.0
  %v858 = vmax.f32 %v842, 0.0
  %v875 = vrot.slane %v845, 7
  %v876 = vsel %vm616, %v875, %v843
  %v877 = vrot.slane %v847, 6
  %v878 = vsel %vm619, %v877, %v876
  %v879 = vrot.slane %v849, 5
  %v880 = vsel %vm622, %v879, %v878
  %v881 = vrot.slane %v846, 7
  %v882 = vsel %vm616, %v881, %v844
  %v883 = vrot.slane %v848, 6
  %v884 = vsel %vm619, %v883, %v882
  %v885 = vrot.slane %v850, 5
  %v886 = vsel %vm622, %v885, %v884
  %v887 = vrot.slane %v853, 7
  %v888 = vsel %vm616, %v887, %v851
  %v889 = vrot.slane %v855, 6
  %v890 = vsel %vm619, %v889, %v888
  %v891 = vrot.slane %v857, 5
  %v892 = vsel %vm622, %v891, %v890
  %v893 = vrot.slane %v854, 7
  %v894 = vsel %vm616, %v893, %v852
  %v895 = vrot.slane %v856, 6
  %v896 = vsel %vm619, %v895, %v894
  %v897 = vrot.slane %v858, 5
  %v898 = vsel %vm622, %v897, %v896
  %903 = vrot.lane.b32.xlu0 %v880, 17
  %v904 = vpop.permute.xlu0 %903
  %905 = vrot.lane.b32.xlu0 %v892, 17
  %v906 = vpop.permute.xlu0 %905
  %907 = vrot.lane.b32.xlu0 %v886, 17
  %v908 = vpop.permute.xlu0 %907
  %909 = vrot.lane.b32.xlu0 %v898, 17
  %v910 = vpop.permute.xlu0 %909
  %v911 = vsel %vm135, %v904, %v908
  %v912 = vsel %vm135, %v906, %v910
  %v913 = vsel %vm135, %v908, %v904
  %v914 = vsel %vm135, %v910, %v906
  %v915 = vsel %vm142, %v913, 0.0
  %v916 = vsel %vm143, %v911, 0.0
  %v917 = vsel %vm142, %v914, 0.0
  %v918 = vsel %vm143, %v912, 0.0
  %v919 = vld [vmem:[%s9] sm:$0xf]
  %921 = vset.pattern.permute.xlu0 0
  %922 = vperm.xlu0 %921, %v919
  %v923 = vpop.permute.xlu0 %922
  %v925 = vmul.f32 %v915, %v923
  %v926 = vmul.f32 %v916, %v923
  %v927 = vmul.f32 %v917, %v923
  %v928 = vmul.f32 %v918, %v923
  %929 = vrot.lane.b32.xlu0 %v880, 16
  %v930 = vpop.permute.xlu0 %929
  %931 = vrot.lane.b32.xlu0 %v892, 16
  %v932 = vpop.permute.xlu0 %931
  %933 = vrot.lane.b32.xlu0 %v886, 16
  %v934 = vpop.permute.xlu0 %933
  %935 = vrot.lane.b32.xlu0 %v898, 16
  %v936 = vpop.permute.xlu0 %935
  %v937 = vsel %vm166, %v930, %v934
  %v938 = vsel %vm166, %v932, %v936
  %v939 = vsel %vm166, %v934, %v930
  %v940 = vsel %vm166, %v936, %v932
  %v941 = vsel %vm173, %v939, 0.0
  %v942 = vsel %vm174, %v937, 0.0
  %v943 = vsel %vm173, %v940, 0.0
  %v944 = vsel %vm174, %v938, 0.0
  %s945 = scalar_lea.vmem %s9, 4
  %v946 = vld [vmem:[%s945] sm:$0xf]
  %948 = vset.pattern.permute.xlu0 0
  %949 = vperm.xlu0 %948, %v946
  %v950 = vpop.permute.xlu0 %949
  %v952 = vmul.f32 %v941, %v950
  %v953 = vmul.f32 %v942, %v950
  %v954 = vmul.f32 %v943, %v950
  %v955 = vmul.f32 %v944, %v950
  %v956 = vadd.f32 %v925, %v952
  %v957 = vadd.f32 %v926, %v953
  %v958 = vadd.f32 %v927, %v954
  %v959 = vadd.f32 %v928, %v955
  %960 = vrot.lane.b32.xlu0 %v880, 15
  %v961 = vpop.permute.xlu0 %960
  %962 = vrot.lane.b32.xlu0 %v892, 15
  %v963 = vpop.permute.xlu0 %962
  %964 = vrot.lane.b32.xlu0 %v886, 15
  %v965 = vpop.permute.xlu0 %964
  %966 = vrot.lane.b32.xlu0 %v898, 15
  %v967 = vpop.permute.xlu0 %966
  %v968 = vsel %vm202, %v961, %v965
  %v969 = vsel %vm202, %v963, %v967
  %v970 = vsel %vm202, %v965, %v961
  %v971 = vsel %vm202, %v967, %v963
  %v972 = vsel %vm209, %v970, 0.0
  %v973 = vsel %vm210, %v968, 0.0
  %v974 = vsel %vm209, %v971, 0.0
  %v975 = vsel %vm210, %v969, 0.0
  %s976 = scalar_lea.vmem %s9, 8
  %v977 = vld [vmem:[%s976] sm:$0xf]
  %979 = vset.pattern.permute.xlu0 0
  %980 = vperm.xlu0 %979, %v977
  %v981 = vpop.permute.xlu0 %980
  %v983 = vmul.f32 %v972, %v981
  %v984 = vmul.f32 %v973, %v981
  %v985 = vmul.f32 %v974, %v981
  %v986 = vmul.f32 %v975, %v981
  %v987 = vadd.f32 %v956, %v983
  %v988 = vadd.f32 %v957, %v984
  %v989 = vadd.f32 %v958, %v985
  %v990 = vadd.f32 %v959, %v986
  %991 = vrot.lane.b32.xlu0 %v880, 1
  %v992 = vpop.permute.xlu0 %991
  %993 = vrot.lane.b32.xlu0 %v892, 1
  %v994 = vpop.permute.xlu0 %993
  %995 = vrot.lane.b32.xlu0 %v886, 1
  %v996 = vpop.permute.xlu0 %995
  %997 = vrot.lane.b32.xlu0 %v898, 1
  %v998 = vpop.permute.xlu0 %997
  %v999 = vsel %vm238, %v992, %v996
  %v1000 = vsel %vm238, %v994, %v998
  %v1001 = vsel %vm238, %v996, %v992
  %v1002 = vsel %vm238, %v998, %v994
  %v1003 = vsel %vm245, %v1001, 0.0
  %v1004 = vsel %vm246, %v999, 0.0
  %v1005 = vsel %vm245, %v1002, 0.0
  %v1006 = vsel %vm246, %v1000, 0.0
  %s1007 = scalar_lea.vmem %s9, 12
  %v1008 = vld [vmem:[%s1007] sm:$0xf]
  %1010 = vset.pattern.permute.xlu0 0
  %1011 = vperm.xlu0 %1010, %v1008
  %v1012 = vpop.permute.xlu0 %1011
  %v1014 = vmul.f32 %v1003, %v1012
  %v1015 = vmul.f32 %v1004, %v1012
  %v1016 = vmul.f32 %v1005, %v1012
  %v1017 = vmul.f32 %v1006, %v1012
  %v1018 = vadd.f32 %v987, %v1014
  %v1019 = vadd.f32 %v988, %v1015
  %v1020 = vadd.f32 %v989, %v1016
  %v1021 = vadd.f32 %v990, %v1017
  %s1022 = scalar_lea.vmem %s9, 16
  %v1023 = vld [vmem:[%s1022] sm:$0xf]
  %1025 = vset.pattern.permute.xlu0 0
  %1026 = vperm.xlu0 %1025, %v1023
  %v1027 = vpop.permute.xlu0 %1026
  %v1028 = vrot.slane %v1027, 1
  %v1029 = vrot.slane %v1027, 2
  %v1030 = vrot.slane %v1027, 3
  %v1035 = vmul.f32 %v843, %v1027
  %v1036 = vmul.f32 %v844, %v1027
  %v1037 = vmul.f32 %v845, %v1028
  %v1038 = vmul.f32 %v846, %v1028
  %v1039 = vmul.f32 %v847, %v1029
  %v1040 = vmul.f32 %v848, %v1029
  %v1041 = vmul.f32 %v849, %v1030
  %v1042 = vmul.f32 %v850, %v1030
  %v1043 = vmul.f32 %v851, %v1027
  %v1044 = vmul.f32 %v852, %v1027
  %v1045 = vmul.f32 %v853, %v1028
  %v1046 = vmul.f32 %v854, %v1028
  %v1047 = vmul.f32 %v855, %v1029
  %v1048 = vmul.f32 %v856, %v1029
  %v1049 = vmul.f32 %v857, %v1030
  %v1050 = vmul.f32 %v858, %v1030
  %v1067 = vrot.slane %v1037, 7
  %v1068 = vsel %vm616, %v1067, %v1035
  %v1069 = vrot.slane %v1039, 6
  %v1070 = vsel %vm619, %v1069, %v1068
  %v1071 = vrot.slane %v1041, 5
  %v1072 = vsel %vm622, %v1071, %v1070
  %v1073 = vrot.slane %v1038, 7
  %v1074 = vsel %vm616, %v1073, %v1036
  %v1075 = vrot.slane %v1040, 6
  %v1076 = vsel %vm619, %v1075, %v1074
  %v1077 = vrot.slane %v1042, 5
  %v1078 = vsel %vm622, %v1077, %v1076
  %v1079 = vrot.slane %v1045, 7
  %v1080 = vsel %vm616, %v1079, %v1043
  %v1081 = vrot.slane %v1047, 6
  %v1082 = vsel %vm619, %v1081, %v1080
  %v1083 = vrot.slane %v1049, 5
  %v1084 = vsel %vm622, %v1083, %v1082
  %v1085 = vrot.slane %v1046, 7
  %v1086 = vsel %vm616, %v1085, %v1044
  %v1087 = vrot.slane %v1048, 6
  %v1088 = vsel %vm619, %v1087, %v1086
  %v1089 = vrot.slane %v1050, 5
  %v1090 = vsel %vm622, %v1089, %v1088
  %v1095 = vadd.f32 %v1018, %v1072
  %v1096 = vadd.f32 %v1019, %v1078
  %v1097 = vadd.f32 %v1020, %v1084
  %v1098 = vadd.f32 %v1021, %v1090
  %1099 = vrot.lane.b32.xlu0 %v880, 127
  %v1100 = vpop.permute.xlu0 %1099
  %1101 = vrot.lane.b32.xlu0 %v892, 127
  %v1102 = vpop.permute.xlu0 %1101
  %1103 = vrot.lane.b32.xlu0 %v886, 127
  %v1104 = vpop.permute.xlu0 %1103
  %1105 = vrot.lane.b32.xlu0 %v898, 127
  %v1106 = vpop.permute.xlu0 %1105
  %v1107 = vsel %vm289, %v1100, %v1104
  %v1108 = vsel %vm289, %v1102, %v1106
  %v1109 = vsel %vm289, %v1104, %v1100
  %v1110 = vsel %vm289, %v1106, %v1102
  %v1111 = vsel %vm296, %v1107, 0.0
  %v1112 = vsel %vm297, %v1109, 0.0
  %v1113 = vsel %vm296, %v1108, 0.0
  %v1114 = vsel %vm297, %v1110, 0.0
  %s1115 = scalar_lea.vmem %s9, 20
  %v1116 = vld [vmem:[%s1115] sm:$0xf]
  %1118 = vset.pattern.permute.xlu0 0
  %1119 = vperm.xlu0 %1118, %v1116
  %v1120 = vpop.permute.xlu0 %1119
  %v1122 = vmul.f32 %v1111, %v1120
  %v1123 = vmul.f32 %v1112, %v1120
  %v1124 = vmul.f32 %v1113, %v1120
  %v1125 = vmul.f32 %v1114, %v1120
  %v1126 = vadd.f32 %v1095, %v1122
  %v1127 = vadd.f32 %v1096, %v1123
  %v1128 = vadd.f32 %v1097, %v1124
  %v1129 = vadd.f32 %v1098, %v1125
  %1130 = vrot.lane.b32.xlu0 %v880, 113
  %v1131 = vpop.permute.xlu0 %1130
  %1132 = vrot.lane.b32.xlu0 %v892, 113
  %v1133 = vpop.permute.xlu0 %1132
  %1134 = vrot.lane.b32.xlu0 %v886, 113
  %v1135 = vpop.permute.xlu0 %1134
  %1136 = vrot.lane.b32.xlu0 %v898, 113
  %v1137 = vpop.permute.xlu0 %1136
  %v1138 = vsel %vm325, %v1131, %v1135
  %v1139 = vsel %vm325, %v1133, %v1137
  %v1140 = vsel %vm325, %v1135, %v1131
  %v1141 = vsel %vm325, %v1137, %v1133
  %v1142 = vsel %vm332, %v1138, 0.0
  %v1143 = vsel %vm333, %v1140, 0.0
  %v1144 = vsel %vm332, %v1139, 0.0
  %v1145 = vsel %vm333, %v1141, 0.0
  %s1146 = scalar_lea.vmem %s9, 24
  %v1147 = vld [vmem:[%s1146] sm:$0xf]
  %1149 = vset.pattern.permute.xlu0 0
  %1150 = vperm.xlu0 %1149, %v1147
  %v1151 = vpop.permute.xlu0 %1150
  %v1153 = vmul.f32 %v1142, %v1151
  %v1154 = vmul.f32 %v1143, %v1151
  %v1155 = vmul.f32 %v1144, %v1151
  %v1156 = vmul.f32 %v1145, %v1151
  %v1157 = vadd.f32 %v1126, %v1153
  %v1158 = vadd.f32 %v1127, %v1154
  %v1159 = vadd.f32 %v1128, %v1155
  %v1160 = vadd.f32 %v1129, %v1156
  %1161 = vrot.lane.b32.xlu0 %v880, 112
  %v1162 = vpop.permute.xlu0 %1161
  %1163 = vrot.lane.b32.xlu0 %v892, 112
  %v1164 = vpop.permute.xlu0 %1163
  %1165 = vrot.lane.b32.xlu0 %v886, 112
  %v1166 = vpop.permute.xlu0 %1165
  %1167 = vrot.lane.b32.xlu0 %v898, 112
  %v1168 = vpop.permute.xlu0 %1167
  %v1169 = vsel %vm361, %v1162, %v1166
  %v1170 = vsel %vm361, %v1164, %v1168
  %v1171 = vsel %vm361, %v1166, %v1162
  %v1172 = vsel %vm361, %v1168, %v1164
  %v1173 = vsel %vm368, %v1169, 0.0
  %v1174 = vsel %vm369, %v1171, 0.0
  %v1175 = vsel %vm368, %v1170, 0.0
  %v1176 = vsel %vm369, %v1172, 0.0
  %s1177 = scalar_lea.vmem %s9, 28
  %v1178 = vld [vmem:[%s1177] sm:$0xf]
  %1180 = vset.pattern.permute.xlu0 0
  %1181 = vperm.xlu0 %1180, %v1178
  %v1182 = vpop.permute.xlu0 %1181
  %v1184 = vmul.f32 %v1173, %v1182
  %v1185 = vmul.f32 %v1174, %v1182
  %v1186 = vmul.f32 %v1175, %v1182
  %v1187 = vmul.f32 %v1176, %v1182
  %v1188 = vadd.f32 %v1157, %v1184
  %v1189 = vadd.f32 %v1158, %v1185
  %v1190 = vadd.f32 %v1159, %v1186
  %v1191 = vadd.f32 %v1160, %v1187
  %1192 = vrot.lane.b32.xlu0 %v880, 111
  %v1193 = vpop.permute.xlu0 %1192
  %1194 = vrot.lane.b32.xlu0 %v892, 111
  %v1195 = vpop.permute.xlu0 %1194
  %1196 = vrot.lane.b32.xlu0 %v886, 111
  %v1197 = vpop.permute.xlu0 %1196
  %1198 = vrot.lane.b32.xlu0 %v898, 111
  %v1199 = vpop.permute.xlu0 %1198
  %v1200 = vsel %vm397, %v1193, %v1197
  %v1201 = vsel %vm397, %v1195, %v1199
  %v1202 = vsel %vm397, %v1197, %v1193
  %v1203 = vsel %vm397, %v1199, %v1195
  %v1204 = vsel %vm404, %v1200, 0.0
  %v1205 = vsel %vm405, %v1202, 0.0
  %v1206 = vsel %vm404, %v1201, 0.0
  %v1207 = vsel %vm405, %v1203, 0.0
  %s1208 = scalar_lea.vmem %s9, 32
  %v1209 = vld [vmem:[%s1208] sm:$0xf]
  %1211 = vset.pattern.permute.xlu0 0
  %1212 = vperm.xlu0 %1211, %v1209
  %v1213 = vpop.permute.xlu0 %1212
  %v1215 = vmul.f32 %v1204, %v1213
  %v1216 = vmul.f32 %v1205, %v1213
  %v1217 = vmul.f32 %v1206, %v1213
  %v1218 = vmul.f32 %v1207, %v1213
  %v1219 = vadd.f32 %v1188, %v1215
  %v1220 = vadd.f32 %v1189, %v1216
  %v1221 = vadd.f32 %v1190, %v1217
  %v1222 = vadd.f32 %v1191, %v1218
  %v1223 = vld [vmem:[%s10] sm:$0xf]
  %1225 = vset.pattern.permute.xlu0 0
  %1226 = vperm.xlu0 %1225, %v1223
  %v1227 = vpop.permute.xlu0 %1226
  %v1229 = vadd.f32 %v1219, %v1227
  %v1230 = vadd.f32 %v1220, %v1227
  %v1231 = vadd.f32 %v1221, %v1227
  %v1232 = vadd.f32 %v1222, %v1227
  %v1233 = vld [vmem:[%s11] sm:$0xf]
  %v1234 = vld [vmem:[%s11 + $0x4] sm:$0xf]
  %v1235 = vld [vmem:[%s11 + $0x8] sm:$0xf]
  %v1236 = vld [vmem:[%s11 + $0xc] sm:$0xf]
  %v1237 = vld [vmem:[%s11 + $0x10] sm:$0xf]
  %v1238 = vld [vmem:[%s11 + $0x14] sm:$0xf]
  %v1239 = vld [vmem:[%s11 + $0x18] sm:$0xf]
  %v1240 = vld [vmem:[%s11 + $0x1c] sm:$0xf]
  %1242 = vset.pattern.permute.xlu0 0
  %1243 = vperm.xlu0 %1242, %v1233
  %v1244 = vpop.permute.xlu0 %1243
  %1247 = vset.pattern.permute.xlu0 0
  %1248 = vperm.xlu0 %1247, %v1234
  %v1249 = vpop.permute.xlu0 %1248
  %1252 = vset.pattern.permute.xlu0 0
  %1253 = vperm.xlu0 %1252, %v1235
  %v1254 = vpop.permute.xlu0 %1253
  %1257 = vset.pattern.permute.xlu0 0
  %1258 = vperm.xlu0 %1257, %v1236
  %v1259 = vpop.permute.xlu0 %1258
  %1262 = vset.pattern.permute.xlu0 0
  %1263 = vperm.xlu0 %1262, %v1237
  %v1264 = vpop.permute.xlu0 %1263
  %1267 = vset.pattern.permute.xlu0 0
  %1268 = vperm.xlu0 %1267, %v1238
  %v1269 = vpop.permute.xlu0 %1268
  %1272 = vset.pattern.permute.xlu0 0
  %1273 = vperm.xlu0 %1272, %v1239
  %v1274 = vpop.permute.xlu0 %1273
  %1277 = vset.pattern.permute.xlu0 0
  %1278 = vperm.xlu0 %1277, %v1240
  %v1279 = vpop.permute.xlu0 %1278
  %v1281 = vmul.f32 %v1229, %v1244
  %v1282 = vmul.f32 %v1230, %v1244
  %v1283 = vmul.f32 %v1229, %v1249
  %v1284 = vmul.f32 %v1230, %v1249
  %v1285 = vmul.f32 %v1229, %v1254
  %v1286 = vmul.f32 %v1230, %v1254
  %v1287 = vmul.f32 %v1229, %v1259
  %v1288 = vmul.f32 %v1230, %v1259
  %v1289 = vmul.f32 %v1229, %v1264
  %v1290 = vmul.f32 %v1230, %v1264
  %v1291 = vmul.f32 %v1229, %v1269
  %v1292 = vmul.f32 %v1230, %v1269
  %v1293 = vmul.f32 %v1229, %v1274
  %v1294 = vmul.f32 %v1230, %v1274
  %v1295 = vmul.f32 %v1229, %v1279
  %v1296 = vmul.f32 %v1230, %v1279
  %v1297 = vmul.f32 %v1231, %v1244
  %v1298 = vmul.f32 %v1232, %v1244
  %v1299 = vmul.f32 %v1231, %v1249
  %v1300 = vmul.f32 %v1232, %v1249
  %v1301 = vmul.f32 %v1231, %v1254
  %v1302 = vmul.f32 %v1232, %v1254
  %v1303 = vmul.f32 %v1231, %v1259
  %v1304 = vmul.f32 %v1232, %v1259
  %v1305 = vmul.f32 %v1231, %v1264
  %v1306 = vmul.f32 %v1232, %v1264
  %v1307 = vmul.f32 %v1231, %v1269
  %v1308 = vmul.f32 %v1232, %v1269
  %v1309 = vmul.f32 %v1231, %v1274
  %v1310 = vmul.f32 %v1232, %v1274
  %v1311 = vmul.f32 %v1231, %v1279
  %v1312 = vmul.f32 %v1232, %v1279
  %v1313 = vsel %vm646, %v1281, 0.0
  %v1314 = vrot.slane %v1313, 4
  %v1315 = vadd.f32 %v1313, %v1314
  %v1316 = vrot.slane %v1315, 2
  %v1317 = vadd.f32 %v1315, %v1316
  %v1318 = vrot.slane %v1317, 1
  %v1319 = vadd.f32 %v1317, %v1318
  %v1320 = vsel %vm646, %v1282, 0.0
  %v1321 = vrot.slane %v1320, 4
  %v1322 = vadd.f32 %v1320, %v1321
  %v1323 = vrot.slane %v1322, 2
  %v1324 = vadd.f32 %v1322, %v1323
  %v1325 = vrot.slane %v1324, 1
  %v1326 = vadd.f32 %v1324, %v1325
  %v1327 = vsel %vm646, %v1283, 0.0
  %v1328 = vrot.slane %v1327, 4
  %v1329 = vadd.f32 %v1327, %v1328
  %v1330 = vrot.slane %v1329, 2
  %v1331 = vadd.f32 %v1329, %v1330
  %v1332 = vrot.slane %v1331, 1
  %v1333 = vadd.f32 %v1331, %v1332
  %v1334 = vsel %vm646, %v1284, 0.0
  %v1335 = vrot.slane %v1334, 4
  %v1336 = vadd.f32 %v1334, %v1335
  %v1337 = vrot.slane %v1336, 2
  %v1338 = vadd.f32 %v1336, %v1337
  %v1339 = vrot.slane %v1338, 1
  %v1340 = vadd.f32 %v1338, %v1339
  %v1341 = vsel %vm646, %v1285, 0.0
  %v1342 = vrot.slane %v1341, 4
  %v1343 = vadd.f32 %v1341, %v1342
  %v1344 = vrot.slane %v1343, 2
  %v1345 = vadd.f32 %v1343, %v1344
  %v1346 = vrot.slane %v1345, 1
  %v1347 = vadd.f32 %v1345, %v1346
  %v1348 = vsel %vm646, %v1286, 0.0
  %v1349 = vrot.slane %v1348, 4
  %v1350 = vadd.f32 %v1348, %v1349
  %v1351 = vrot.slane %v1350, 2
  %v1352 = vadd.f32 %v1350, %v1351
  %v1353 = vrot.slane %v1352, 1
  %v1354 = vadd.f32 %v1352, %v1353
  %v1355 = vsel %vm646, %v1287, 0.0
  %v1356 = vrot.slane %v1355, 4
  %v1357 = vadd.f32 %v1355, %v1356
  %v1358 = vrot.slane %v1357, 2
  %v1359 = vadd.f32 %v1357, %v1358
  %v1360 = vrot.slane %v1359, 1
  %v1361 = vadd.f32 %v1359, %v1360
  %v1362 = vsel %vm646, %v1288, 0.0
  %v1363 = vrot.slane %v1362, 4
  %v1364 = vadd.f32 %v1362, %v1363
  %v1365 = vrot.slane %v1364, 2
  %v1366 = vadd.f32 %v1364, %v1365
  %v1367 = vrot.slane %v1366, 1
  %v1368 = vadd.f32 %v1366, %v1367
  %v1369 = vsel %vm646, %v1289, 0.0
  %v1370 = vrot.slane %v1369, 4
  %v1371 = vadd.f32 %v1369, %v1370
  %v1372 = vrot.slane %v1371, 2
  %v1373 = vadd.f32 %v1371, %v1372
  %v1374 = vrot.slane %v1373, 1
  %v1375 = vadd.f32 %v1373, %v1374
  %v1376 = vsel %vm646, %v1290, 0.0
  %v1377 = vrot.slane %v1376, 4
  %v1378 = vadd.f32 %v1376, %v1377
  %v1379 = vrot.slane %v1378, 2
  %v1380 = vadd.f32 %v1378, %v1379
  %v1381 = vrot.slane %v1380, 1
  %v1382 = vadd.f32 %v1380, %v1381
  %v1383 = vsel %vm646, %v1291, 0.0
  %v1384 = vrot.slane %v1383, 4
  %v1385 = vadd.f32 %v1383, %v1384
  %v1386 = vrot.slane %v1385, 2
  %v1387 = vadd.f32 %v1385, %v1386
  %v1388 = vrot.slane %v1387, 1
  %v1389 = vadd.f32 %v1387, %v1388
  %v1390 = vsel %vm646, %v1292, 0.0
  %v1391 = vrot.slane %v1390, 4
  %v1392 = vadd.f32 %v1390, %v1391
  %v1393 = vrot.slane %v1392, 2
  %v1394 = vadd.f32 %v1392, %v1393
  %v1395 = vrot.slane %v1394, 1
  %v1396 = vadd.f32 %v1394, %v1395
  %v1397 = vsel %vm646, %v1293, 0.0
  %v1398 = vrot.slane %v1397, 4
  %v1399 = vadd.f32 %v1397, %v1398
  %v1400 = vrot.slane %v1399, 2
  %v1401 = vadd.f32 %v1399, %v1400
  %v1402 = vrot.slane %v1401, 1
  %v1403 = vadd.f32 %v1401, %v1402
  %v1404 = vsel %vm646, %v1294, 0.0
  %v1405 = vrot.slane %v1404, 4
  %v1406 = vadd.f32 %v1404, %v1405
  %v1407 = vrot.slane %v1406, 2
  %v1408 = vadd.f32 %v1406, %v1407
  %v1409 = vrot.slane %v1408, 1
  %v1410 = vadd.f32 %v1408, %v1409
  %v1411 = vsel %vm646, %v1295, 0.0
  %v1412 = vrot.slane %v1411, 4
  %v1413 = vadd.f32 %v1411, %v1412
  %v1414 = vrot.slane %v1413, 2
  %v1415 = vadd.f32 %v1413, %v1414
  %v1416 = vrot.slane %v1415, 1
  %v1417 = vadd.f32 %v1415, %v1416
  %v1418 = vsel %vm646, %v1296, 0.0
  %v1419 = vrot.slane %v1418, 4
  %v1420 = vadd.f32 %v1418, %v1419
  %v1421 = vrot.slane %v1420, 2
  %v1422 = vadd.f32 %v1420, %v1421
  %v1423 = vrot.slane %v1422, 1
  %v1424 = vadd.f32 %v1422, %v1423
  %v1425 = vsel %vm646, %v1297, 0.0
  %v1426 = vrot.slane %v1425, 4
  %v1427 = vadd.f32 %v1425, %v1426
  %v1428 = vrot.slane %v1427, 2
  %v1429 = vadd.f32 %v1427, %v1428
  %v1430 = vrot.slane %v1429, 1
  %v1431 = vadd.f32 %v1429, %v1430
  %v1432 = vsel %vm646, %v1298, 0.0
  %v1433 = vrot.slane %v1432, 4
  %v1434 = vadd.f32 %v1432, %v1433
  %v1435 = vrot.slane %v1434, 2
  %v1436 = vadd.f32 %v1434, %v1435
  %v1437 = vrot.slane %v1436, 1
  %v1438 = vadd.f32 %v1436, %v1437
  %v1439 = vsel %vm646, %v1299, 0.0
  %v1440 = vrot.slane %v1439, 4
  %v1441 = vadd.f32 %v1439, %v1440
  %v1442 = vrot.slane %v1441, 2
  %v1443 = vadd.f32 %v1441, %v1442
  %v1444 = vrot.slane %v1443, 1
  %v1445 = vadd.f32 %v1443, %v1444
  %v1446 = vsel %vm646, %v1300, 0.0
  %v1447 = vrot.slane %v1446, 4
  %v1448 = vadd.f32 %v1446, %v1447
  %v1449 = vrot.slane %v1448, 2
  %v1450 = vadd.f32 %v1448, %v1449
  %v1451 = vrot.slane %v1450, 1
  %v1452 = vadd.f32 %v1450, %v1451
  %v1453 = vsel %vm646, %v1301, 0.0
  %v1454 = vrot.slane %v1453, 4
  %v1455 = vadd.f32 %v1453, %v1454
  %v1456 = vrot.slane %v1455, 2
  %v1457 = vadd.f32 %v1455, %v1456
  %v1458 = vrot.slane %v1457, 1
  %v1459 = vadd.f32 %v1457, %v1458
  %v1460 = vsel %vm646, %v1302, 0.0
  %v1461 = vrot.slane %v1460, 4
  %v1462 = vadd.f32 %v1460, %v1461
  %v1463 = vrot.slane %v1462, 2
  %v1464 = vadd.f32 %v1462, %v1463
  %v1465 = vrot.slane %v1464, 1
  %v1466 = vadd.f32 %v1464, %v1465
  %v1467 = vsel %vm646, %v1303, 0.0
  %v1468 = vrot.slane %v1467, 4
  %v1469 = vadd.f32 %v1467, %v1468
  %v1470 = vrot.slane %v1469, 2
  %v1471 = vadd.f32 %v1469, %v1470
  %v1472 = vrot.slane %v1471, 1
  %v1473 = vadd.f32 %v1471, %v1472
  %v1474 = vsel %vm646, %v1304, 0.0
  %v1475 = vrot.slane %v1474, 4
  %v1476 = vadd.f32 %v1474, %v1475
  %v1477 = vrot.slane %v1476, 2
  %v1478 = vadd.f32 %v1476, %v1477
  %v1479 = vrot.slane %v1478, 1
  %v1480 = vadd.f32 %v1478, %v1479
  %v1481 = vsel %vm646, %v1305, 0.0
  %v1482 = vrot.slane %v1481, 4
  %v1483 = vadd.f32 %v1481, %v1482
  %v1484 = vrot.slane %v1483, 2
  %v1485 = vadd.f32 %v1483, %v1484
  %v1486 = vrot.slane %v1485, 1
  %v1487 = vadd.f32 %v1485, %v1486
  %v1488 = vsel %vm646, %v1306, 0.0
  %v1489 = vrot.slane %v1488, 4
  %v1490 = vadd.f32 %v1488, %v1489
  %v1491 = vrot.slane %v1490, 2
  %v1492 = vadd.f32 %v1490, %v1491
  %v1493 = vrot.slane %v1492, 1
  %v1494 = vadd.f32 %v1492, %v1493
  %v1495 = vsel %vm646, %v1307, 0.0
  %v1496 = vrot.slane %v1495, 4
  %v1497 = vadd.f32 %v1495, %v1496
  %v1498 = vrot.slane %v1497, 2
  %v1499 = vadd.f32 %v1497, %v1498
  %v1500 = vrot.slane %v1499, 1
  %v1501 = vadd.f32 %v1499, %v1500
  %v1502 = vsel %vm646, %v1308, 0.0
  %v1503 = vrot.slane %v1502, 4
  %v1504 = vadd.f32 %v1502, %v1503
  %v1505 = vrot.slane %v1504, 2
  %v1506 = vadd.f32 %v1504, %v1505
  %v1507 = vrot.slane %v1506, 1
  %v1508 = vadd.f32 %v1506, %v1507
  %v1509 = vsel %vm646, %v1309, 0.0
  %v1510 = vrot.slane %v1509, 4
  %v1511 = vadd.f32 %v1509, %v1510
  %v1512 = vrot.slane %v1511, 2
  %v1513 = vadd.f32 %v1511, %v1512
  %v1514 = vrot.slane %v1513, 1
  %v1515 = vadd.f32 %v1513, %v1514
  %v1516 = vsel %vm646, %v1310, 0.0
  %v1517 = vrot.slane %v1516, 4
  %v1518 = vadd.f32 %v1516, %v1517
  %v1519 = vrot.slane %v1518, 2
  %v1520 = vadd.f32 %v1518, %v1519
  %v1521 = vrot.slane %v1520, 1
  %v1522 = vadd.f32 %v1520, %v1521
  %v1523 = vsel %vm646, %v1311, 0.0
  %v1524 = vrot.slane %v1523, 4
  %v1525 = vadd.f32 %v1523, %v1524
  %v1526 = vrot.slane %v1525, 2
  %v1527 = vadd.f32 %v1525, %v1526
  %v1528 = vrot.slane %v1527, 1
  %v1529 = vadd.f32 %v1527, %v1528
  %v1530 = vsel %vm646, %v1312, 0.0
  %v1531 = vrot.slane %v1530, 4
  %v1532 = vadd.f32 %v1530, %v1531
  %v1533 = vrot.slane %v1532, 2
  %v1534 = vadd.f32 %v1532, %v1533
  %v1535 = vrot.slane %v1534, 1
  %v1536 = vadd.f32 %v1534, %v1535
  %v1537 = vld [vmem:[%s12] sm:$0xff]
  %1539 = vset.pattern.permute.xlu0 0
  %1540 = vperm.xlu0 %1539, %v1537
  %v1541 = vpop.permute.xlu0 %1540
  %v1542 = vrot.slane %v1541, 1
  %v1543 = vrot.slane %v1541, 2
  %v1544 = vrot.slane %v1541, 3
  %v1545 = vrot.slane %v1541, 4
  %v1546 = vrot.slane %v1541, 5
  %v1547 = vrot.slane %v1541, 6
  %v1548 = vrot.slane %v1541, 7
  %v1557 = vadd.f32 %v1319, %v1541
  %v1558 = vadd.f32 %v1326, %v1541
  %v1559 = vadd.f32 %v1333, %v1542
  %v1560 = vadd.f32 %v1340, %v1542
  %v1561 = vadd.f32 %v1347, %v1543
  %v1562 = vadd.f32 %v1354, %v1543
  %v1563 = vadd.f32 %v1361, %v1544
  %v1564 = vadd.f32 %v1368, %v1544
  %v1565 = vadd.f32 %v1375, %v1545
  %v1566 = vadd.f32 %v1382, %v1545
  %v1567 = vadd.f32 %v1389, %v1546
  %v1568 = vadd.f32 %v1396, %v1546
  %v1569 = vadd.f32 %v1403, %v1547
  %v1570 = vadd.f32 %v1410, %v1547
  %v1571 = vadd.f32 %v1417, %v1548
  %v1572 = vadd.f32 %v1424, %v1548
  %v1573 = vadd.f32 %v1431, %v1541
  %v1574 = vadd.f32 %v1438, %v1541
  %v1575 = vadd.f32 %v1445, %v1542
  %v1576 = vadd.f32 %v1452, %v1542
  %v1577 = vadd.f32 %v1459, %v1543
  %v1578 = vadd.f32 %v1466, %v1543
  %v1579 = vadd.f32 %v1473, %v1544
  %v1580 = vadd.f32 %v1480, %v1544
  %v1581 = vadd.f32 %v1487, %v1545
  %v1582 = vadd.f32 %v1494, %v1545
  %v1583 = vadd.f32 %v1501, %v1546
  %v1584 = vadd.f32 %v1508, %v1546
  %v1585 = vadd.f32 %v1515, %v1547
  %v1586 = vadd.f32 %v1522, %v1547
  %v1587 = vadd.f32 %v1529, %v1548
  %v1588 = vadd.f32 %v1536, %v1548
  %v1621 = vrot.slane %v1559, 7
  %v1622 = vsel %vm616, %v1621, %v1557
  %v1623 = vrot.slane %v1561, 6
  %v1624 = vsel %vm619, %v1623, %v1622
  %v1625 = vrot.slane %v1563, 5
  %v1626 = vsel %vm622, %v1625, %v1624
  %v1627 = vrot.slane %v1565, 4
  %vm1628 = vcmask 1044484
  %v1629 = vsel %vm1628, %v1627, %v1626
  %v1630 = vrot.slane %v1567, 3
  %vm1631 = vcmask 1045509
  %v1632 = vsel %vm1631, %v1630, %v1629
  %v1633 = vrot.slane %v1569, 2
  %vm1634 = vcmask 1046534
  %v1635 = vsel %vm1634, %v1633, %v1632
  %v1636 = vrot.slane %v1571, 1
  %vm1637 = vcmask 1047559
  %v1638 = vsel %vm1637, %v1636, %v1635
  %v1639 = vrot.slane %v1560, 7
  %v1640 = vsel %vm616, %v1639, %v1558
  %v1641 = vrot.slane %v1562, 6
  %v1642 = vsel %vm619, %v1641, %v1640
  %v1643 = vrot.slane %v1564, 5
  %v1644 = vsel %vm622, %v1643, %v1642
  %v1645 = vrot.slane %v1566, 4
  %v1646 = vsel %vm1628, %v1645, %v1644
  %v1647 = vrot.slane %v1568, 3
  %v1648 = vsel %vm1631, %v1647, %v1646
  %v1649 = vrot.slane %v1570, 2
  %v1650 = vsel %vm1634, %v1649, %v1648
  %v1651 = vrot.slane %v1572, 1
  %v1652 = vsel %vm1637, %v1651, %v1650
  %v1653 = vrot.slane %v1575, 7
  %v1654 = vsel %vm616, %v1653, %v1573
  %v1655 = vrot.slane %v1577, 6
  %v1656 = vsel %vm619, %v1655, %v1654
  %v1657 = vrot.slane %v1579, 5
  %v1658 = vsel %vm622, %v1657, %v1656
  %v1659 = vrot.slane %v1581, 4
  %v1660 = vsel %vm1628, %v1659, %v1658
  %v1661 = vrot.slane %v1583, 3
  %v1662 = vsel %vm1631, %v1661, %v1660
  %v1663 = vrot.slane %v1585, 2
  %v1664 = vsel %vm1634, %v1663, %v1662
  %v1665 = vrot.slane %v1587, 1
  %v1666 = vsel %vm1637, %v1665, %v1664
  %v1667 = vrot.slane %v1576, 7
  %v1668 = vsel %vm616, %v1667, %v1574
  %v1669 = vrot.slane %v1578, 6
  %v1670 = vsel %vm619, %v1669, %v1668
  %v1671 = vrot.slane %v1580, 5
  %v1672 = vsel %vm622, %v1671, %v1670
  %v1673 = vrot.slane %v1582, 4
  %v1674 = vsel %vm1628, %v1673, %v1672
  %v1675 = vrot.slane %v1584, 3
  %v1676 = vsel %vm1631, %v1675, %v1674
  %v1677 = vrot.slane %v1586, 2
  %v1678 = vsel %vm1634, %v1677, %v1676
  %v1679 = vrot.slane %v1588, 1
  %v1680 = vsel %vm1637, %v1679, %v1678
  %1685 = vst [vmem:[%s13] sm:$0xff] %v1638
  %1686 = vst [vmem:[%s13 + $0x8] sm:$0xff] %v1652
  %1687 = vst [vmem:[%s13 + $0x10] sm:$0xff] %v1666
  %1688 = vst [vmem:[%s13 + $0x18] sm:$0xff] %v1680
  // Predicated region
  $region54: #{conv_block_forward.1} parent=0 // pred_check
    _
  $region55: #{conv_block_forward.1} parent=0 // pred_check_branch
    %1690 = sbr.rel (0) target = $region57
  $region56: #{conv_block_forward.1} parent=0 // pred_region
    _
  $region57: #{conv_block_forward.1} parent=0 // pred_fallthru
    _
  // Predicated region
  $region58: #{conv_block_forward.1} parent=0 // pred_check
    _
  $region59: #{conv_block_forward.1} parent=0 // pred_check_branch
    %1692 = sbr.rel (0) target = $region61
  $region60: #{conv_block_forward.1} parent=0 // pred_region
    _
  $region61: #{conv_block_forward.1} parent=0 // pred_fallthru
    _

</llo_original>
